<compile_context>
chip_gen: v5e
topology: v5e:2x2
jax: 0.10.0
libtpu: 0.0.40
codegen_flags: <defaults>
</compile_context>

<pallas_src>
import functools
import math

import jax
import jax.numpy as jnp
from jax.experimental import pallas as pl
from jax.experimental.pallas import tpu as pltpu

CLIP_MEAN = (0.48145466, 0.4578275, 0.40821073)
CLIP_STD = (0.26862954, 0.26130258, 0.27577711)


def _vmem_budget_bytes():
    """~75% of physical VMEM (≈96 MiB v5e/v6e, ≈48 MiB v7x); safe fallback."""
    try:
        info = pltpu.get_tpu_info()
        cap = int(getattr(info, "vmem_capacity_bytes", 0))
        if cap > 0:
            return (cap * 3) // 4
    except Exception:
        pass
    return 32 * 1024 * 1024


def _largest_divisor_tile(k, per_k_bytes, resident_bytes, budget):
    """Largest multiple-of-128 divisor of k whose working set fits budget."""
    best = None
    t = 128
    while t <= k:
        if k % t == 0 and resident_bytes + per_k_bytes * t <= budget:
            best = t
        t += 128
    if best is None:
        best = 128 if k % 128 == 0 else k
    return best


# ----------------------------------------------------------------------------
# Kernel 1: image encoder  ->  l2norm(x @ W' + bias)
#   grid = (M tiles, K tiles); K is the reduction axis ("arbitrary", last),
#   M is "parallel" (megacore-shardable on v7x).  bf16 operands, f32 output
#   block used directly as the accumulator (resident across the K axis).
# ----------------------------------------------------------------------------
def _encode_kernel(x_ref, w_ref, b_ref, o_ref):
    k = pl.program_id(1)

    @pl.when(k == 0)
    def _init():
        o_ref[...] = jnp.zeros_like(o_ref)

    o_ref[...] += jnp.dot(x_ref[...], w_ref[...],
                          preferred_element_type=jnp.float32)

    @pl.when(k == pl.num_programs(1) - 1)
    def _finalize():
        f = o_ref[...] + b_ref[...]
        inv = jax.lax.rsqrt(
            jnp.maximum(jnp.sum(f * f, axis=-1, keepdims=True),
                        jnp.float32(1e-16)))
        o_ref[...] = f * inv


def encode_image_pallas(x_bf16, w_bf16, bias_f32, vmem_budget):
    n, k = x_bf16.shape
    d = w_bf16.shape[1]
    tm = n
    for cand in (256, 128):          # larger tm => fewer W' re-streams
        if n % cand == 0:
            tm = cand
            break
    # Per-unit-of-tk bytes (double-buffered x + W tiles) and resident bytes.
    per_k = 2 * (tm * 2 + d * 2)
    resident = 2 * d * 4 + 2 * tm * d * 4
    tk = _largest_divisor_tile(k, per_k, resident, vmem_budget)
    # When tk == k, W's block index is constant -> DMA'd exactly once.
    # TODO(synk): fp8 (v7x) / int8 weight-only storage of W' would halve the
    # dominant W' HBM stream at real CLIP sizes.
    return pl.pallas_call(
        _encode_kernel,
        out_shape=jax.ShapeDtypeStruct((n, d), jnp.float32),
        grid_spec=pltpu.PrefetchScalarGridSpec(
            num_scalar_prefetch=0,
            grid=(n // tm, k // tk),
            in_specs=[
                pl.BlockSpec((tm, tk), lambda i, j: (i, j)),   # x (bf16)
                pl.BlockSpec((tk, d), lambda i, j: (j, 0)),    # W' (bf16)
                pl.BlockSpec((1, d), lambda i, j: (0, 0)),     # bias (f32)
            ],
            out_specs=pl.BlockSpec((tm, d), lambda i, j: (i, 0))),
        compiler_params=pltpu.CompilerParams(
            dimension_semantics=("parallel", "arbitrary"),
            vmem_limit_bytes=vmem_budget),
    )(x_bf16, w_bf16, bias_f32)


# ----------------------------------------------------------------------------
# Kernel 2: fused forward()  —  encode(image_1) + MSE + all similarity math.
#   grid = (K tiles,) (reduction axis).  Streams both images (bf16) once.
#   NOTE: the whole batch N lives in a single block (required by the batch
#   roll for view consistency).  Larger N amortizes the per-call W' stream.
# ----------------------------------------------------------------------------
def _forward_kernel(img0_ref, img1_ref, w_ref, b_ref, f0_ref, t0_ref, t1_ref,
                    o_ref, acc_ref, mse_ref, *, inv_nk, roll_shift):
    j = pl.program_id(0)

    @pl.when(j == 0)
    def _init():
        acc_ref[...] = jnp.zeros_like(acc_ref)
        mse_ref[...] = jnp.zeros_like(mse_ref)

    x1 = img1_ref[...]                                   # bf16 (N, tk)
    acc_ref[...] += jnp.dot(x1, w_ref[...],
                            preferred_element_type=jnp.float32)
    # MSE path in f32 (v5e has no bf16 VALU; avoids extra pack/unpack ops).
    diff = x1.astype(jnp.float32) - img0_ref[...].astype(jnp.float32)
    mse_ref[...] += jnp.sum(diff * diff, axis=-1, keepdims=True)

    @pl.when(j == pl.num_programs(0) - 1)
    def _finalize():
        eps2 = jnp.float32(1e-16)   # clamp ||v||^2 (torch eps = 1e-8 on norm)

        def l2norm(x):
            return x * jax.lax.rsqrt(
                jnp.maximum(jnp.sum(x * x, axis=-1, keepdims=True), eps2))

        def cos(a, b):
            num = jnp.sum(a * b, axis=-1, keepdims=True)
            return num * jax.lax.rsqrt(
                jnp.maximum(jnp.sum(a * a, axis=-1, keepdims=True), eps2) *
                jnp.maximum(jnp.sum(b * b, axis=-1, keepdims=True), eps2))

        f1 = l2norm(acc_ref[...] + b_ref[...])   # encode_image L2 norm
        f0 = f0_ref[...]                          # cached, already unit-norm
        t0 = t0_ref[...]
        t1 = t1_ref[...]

        # Unit-norm inputs -> cosine similarity is just a row dot product.
        sim_0 = jnp.sum(f0 * t0, axis=-1, keepdims=True)
        sim_1 = jnp.sum(f1 * t1, axis=-1, keepdims=True)
        sim_image = jnp.sum(f0 * f1, axis=-1, keepdims=True)
        sim_direction = cos(f1 - f0, t1 - t0)

        # shifted = cat(f[1:], f[:1]) == circular roll by (N-1) on the batch
        # (sublane) axis -> XLU rotate, free alongside the VPU work.
        vd0 = pltpu.roll(f0, shift=roll_shift, axis=0) - f0
        vd1 = pltpu.roll(f1, shift=roll_shift, axis=0) - f1
        sim_view = cos(vd0, vd1)

        # TODO(synk): LPIPS uses a pretrained VGG perceptual net; per-pixel
        # MSE between edited and original images is the stand-in.
        lpips_proxy = jnp.sum(mse_ref[...]) * jnp.float32(inv_nk)

        vals = (jnp.mean(sim_0), jnp.mean(sim_1), jnp.mean(sim_direction),
                jnp.mean(sim_image), jnp.mean(sim_view), lpips_proxy)
        # Lane-dense (1,128) output tile -> single unmasked store.
        col = jax.lax.broadcasted_iota(jnp.int32, (1, 128), 1)
        out = jnp.zeros((1, 128), jnp.float32)
        for i, v in enumerate(vals):
            out = jnp.where(col == i, v, out)
        o_ref[...] = out


def forward_pallas(img0_bf16, img1_bf16, w_bf16, bias_f32, f0, t0, t1,
                   vmem_budget):
    n, k = img0_bf16.shape
    d = w_bf16.shape[1]
    # Resident bytes: f32 acc + mse scratch, bias + f0/t0/t1 (2 bufs), output.
    resident = (n * d * 4 + n * 4
                + 2 * (d * 4 + 3 * n * d * 4)
                + 2 * 128 * 4)
    per_k = 2 * (2 * n * 2 + d * 2)   # img0 + img1 + W' tiles, bf16, 2 bufs
    tk = _largest_divisor_tile(k, per_k, resident, vmem_budget)
    n_steps = k // tk                  # == 1 at toy size: zero pipeline steps

    kernel = functools.partial(_forward_kernel,
                               inv_nk=1.0 / float(n * k),
                               roll_shift=(n - 1) % n)

    w_spec_kwargs = {}
    if n_steps >= 8:
        # Only when K stays heavily tiled: deepen W' buffering to hide its DMA.
        w_spec_kwargs["pipeline_mode"] = pl.Buffered(3)

    # TODO(synk): on v7x a leading "parallel" D-split axis (per-core partial
    # accumulators + tiny combine for the full-D norms/rolls) could use both
    # TensorCores; skipped while the kernel is HBM-bound.
    out = pl.pallas_call(
        kernel,
        out_shape=jax.ShapeDtypeStruct((1, 128), jnp.float32),
        grid_spec=pltpu.PrefetchScalarGridSpec(
            num_scalar_prefetch=0,
            grid=(n_steps,),
            in_specs=[
                pl.BlockSpec((n, tk), lambda j: (0, j)),   # image_0 (bf16)
                pl.BlockSpec((n, tk), lambda j: (0, j)),   # image_1 (bf16)
                pl.BlockSpec((tk, d), lambda j: (j, 0), **w_spec_kwargs),
                pl.BlockSpec((1, d), lambda j: (0, 0)),    # bias
                pl.BlockSpec((n, d), lambda j: (0, 0)),    # image_features_0
                pl.BlockSpec((n, d), lambda j: (0, 0)),    # text_features_0
                pl.BlockSpec((n, d), lambda j: (0, 0)),    # text_features_1
            ],
            out_specs=pl.BlockSpec((1, 128), lambda j: (0, 0)),
            scratch_shapes=[pltpu.VMEM((n, d), jnp.float32),   # f1 accumulator
                            pltpu.VMEM((n, 1), jnp.float32)]), # MSE row sums
        compiler_params=pltpu.CompilerParams(
            dimension_semantics=("arbitrary",),
            vmem_limit_bytes=vmem_budget),
    )(img0_bf16, img1_bf16, w_bf16, bias_f32, f0, t0, t1)
    return tuple(out[0, i] for i in range(6))


# ----------------------------------------------------------------------------
# Module-equivalent wrapper (glue in plain JAX)
# ----------------------------------------------------------------------------
class ClipSimilarityPallas:
    def __init__(self, c=3, h=32, w=32, d=128, seed=42):
        assert c == 3, "CLIP normalization constants are 3-channel"
        assert d % 128 == 0, "keep feature dim lane-dense"
        self.c, self.h, self.w, self.d = c, h, w, d
        self.k = c * h * w
        self.vmem_budget = _vmem_budget_bytes()
        key = jax.random.PRNGKey(seed)
        # Deterministic synthetic projection standing in for the CLIP backbone.
        # TODO(synk): real CLIP image/text transformers are not representable;
        # a fixed random linear projection is used instead.
        w_raw = jax.random.normal(key, (self.k, d), dtype=jnp.float32)
        w_raw = w_raw / math.sqrt(self.k)
        mean_flat = jnp.repeat(jnp.asarray(CLIP_MEAN, jnp.float32), h * w)
        std_flat = jnp.repeat(jnp.asarray(CLIP_STD, jnp.float32), h * w)
        # Fold (x - mean)/std into the projection: (x-mean)/std @ W = x@W' + b
        w_folded = w_raw / std_flat[:, None]
        bias = -(mean_flat @ w_folded)
        self.bias = bias.reshape(1, d).astype(jnp.float32)
        self.proj_bf16 = w_folded.astype(jnp.bfloat16)   # bf16 MXU operand

    def encode_image(self, image):
        # TODO(synk): original bicubic-resizes to the CLIP input resolution
        # (224/336); input resolution is kept (no clean Pallas bicubic).
        n = image.shape[0]
        x = image.reshape(n, self.k).astype(jnp.bfloat16)
        return encode_image_pallas(x, self.proj_bf16, self.bias,
                                   self.vmem_budget)

    def encode_text(self, text, n):
        # TODO(synk): CLIP tokenizer + text transformer; deterministic hash of
        # the caption string -> synthetic unit-norm text embedding.
        seed = sum(ord(ch) for ch in text) % (2**31 - 1)
        t = jax.random.normal(jax.random.PRNGKey(seed), (1, self.d),
                              dtype=jnp.float32)
        t = t / jnp.linalg.norm(t, axis=1, keepdims=True)
        return jnp.tile(t, (n, 1))

    def init_ori_imgs(self, image, text):
        n = image.shape[0]
        # Streamed in bf16 (halves image HBM traffic; MSE math stays f32).
        self.img0_flat = image.reshape(n, self.k).astype(jnp.bfloat16)
        self.image_features_0 = self.encode_image(image)
        self.text_features_0 = self.encode_text(text, n)
        # sim_0_mean / view_direction_0 are recomputed (identically, cheaply)
        # inside the fused forward kernel from the cached f0 / t0 features.

    def forward(self, image_1, text_1):
        n = image_1.shape[0]
        t1 = self.encode_text(text_1, n)
        img1 = image_1.reshape(n, self.k).astype(jnp.bfloat16)
        return forward_pallas(self.img0_flat, img1, self.proj_bf16, self.bias,
                              self.image_features_0, self.text_features_0, t1,
                              self.vmem_budget)


if __name__ == "__main__":
    # N=8 is deliberately small; the W' stream is paid per call regardless of
    # N, so larger batches amortize it — this is the pathological case.
    N, C, H, W, D = 8, 3, 32, 32, 128
    key = jax.random.PRNGKey(0)
    k0, k1 = jax.random.split(key)
    image_0 = jax.random.uniform(k0, (N, C, H, W), dtype=jnp.float32)
    image_1 = jax.random.uniform(k1, (N, C, H, W), dtype=jnp.float32)

    model = ClipSimilarityPallas(c=C, h=H, w=W, d=D)
    model.init_ori_imgs(image_0, "a photo of a person")
    outs = model.forward(image_1, "a photo of an astronaut")
    outs = jax.block_until_ready(outs)
    assert len(outs) == 6 and all(bool(jnp.isfinite(o)) for o in outs)
    print("KERNEL_OK")
</pallas_src>

<mosaic_0001>
module attributes {stable_mosaic.version = 11 : i64} {
  func.func @_encode_kernel(%arg0: i32, %arg1: i32, %arg2: memref<8x3072xbf16, #tpu.memory_space<vmem>>, %arg3: memref<3072x128xbf16, #tpu.memory_space<vmem>>, %arg4: memref<1x128xf32, #tpu.memory_space<vmem>>, %arg5: memref<8x128xf32, #tpu.memory_space<vmem>>) attributes {dimension_semantics = [#tpu.dimension_semantics<parallel>, #tpu.dimension_semantics<arbitrary>], iteration_bounds = array<i64: 1, 1>, scalar_prefetch = 0 : i64, scratch_operands = 0 : i64, tpu.core_type = #tpu.core_type<tc>, window_params = [{transform_indices = @transform_0, window_bounds = array<i64: 8, 3072>}, {transform_indices = @transform_1, window_bounds = array<i64: 3072, 128>}, {pipeline_mode = #tpu.pipeline_mode<synchronous>, transform_indices = @transform_2, window_bounds = array<i64: 1, 128>}, {transform_indices = @transform_3, window_bounds = array<i64: 8, 128>}]} {
    %c0_i32 = arith.constant 0 : i32
    %0 = arith.cmpi eq, %arg1, %c0_i32 : i32
    %1 = arith.extui %0 : i1 to i32
    %c0_i32_0 = arith.constant 0 : i32
    %2 = arith.cmpi ne, %1, %c0_i32_0 : i32
    scf.if %2 {
      %cst_10 = arith.constant 0.000000e+00 : f32
      %12 = vector.broadcast %cst_10 : f32 to vector<8x128xf32>
      %c0_11 = arith.constant 0 : index
      %c0_12 = arith.constant 0 : index
      %13 = vector.load %arg5[%c0_11, %c0_12] : memref<8x128xf32, #tpu.memory_space<vmem>>, vector<8x128xf32>
      tpu.vector_store %arg5[%c0_11, %c0_12], %12 {strides = array<i32>} : memref<8x128xf32, #tpu.memory_space<vmem>>, vector<8x128xf32>,
    } else {
    }
    %c0 = arith.constant 0 : index
    %c0_1 = arith.constant 0 : index
    %3 = vector.load %arg5[%c0, %c0_1] : memref<8x128xf32, #tpu.memory_space<vmem>>, vector<8x128xf32>
    %c0_2 = arith.constant 0 : index
    %c0_3 = arith.constant 0 : index
    %4 = vector.load %arg2[%c0_2, %c0_3] : memref<8x3072xbf16, #tpu.memory_space<vmem>>, vector<8x3072xbf16>
    %c0_4 = arith.constant 0 : index
    %c0_5 = arith.constant 0 : index
    %5 = vector.load %arg3[%c0_4, %c0_5] : memref<3072x128xbf16, #tpu.memory_space<vmem>>, vector<3072x128xbf16>
    %cst = arith.constant dense<0.000000e+00> : vector<8x128xf32>
    %6 = tpu.matmul %4, %5, %cst {dimension_numbers = #tpu.dot_dimension_numbers<[1], [0], [0], [1], [0, 0, 1, 1], [], []>} : vector<8x3072xbf16>, vector<3072x128xbf16>, vector<8x128xf32> -> vector<8x128xf32>
    %7 = arith.addf %3, %6 : vector<8x128xf32>
    %c0_6 = arith.constant 0 : index
    %c0_7 = arith.constant 0 : index
    %8 = vector.load %arg5[%c0_6, %c0_7] : memref<8x128xf32, #tpu.memory_space<vmem>>, vector<8x128xf32>
    tpu.vector_store %arg5[%c0_6, %c0_7], %7 {strides = array<i32>} : memref<8x128xf32, #tpu.memory_space<vmem>>, vector<8x128xf32>,
    %c0_i32_8 = arith.constant 0 : i32
    %9 = arith.cmpi eq, %arg1, %c0_i32_8 : i32
    %10 = arith.extui %9 : i1 to i32
    %c0_i32_9 = arith.constant 0 : i32
    %11 = arith.cmpi ne, %10, %c0_i32_9 : i32
    scf.if %11 {
      %c0_10 = arith.constant 0 : index
      %c0_11 = arith.constant 0 : index
      %12 = vector.load %arg5[%c0_10, %c0_11] : memref<8x128xf32, #tpu.memory_space<vmem>>, vector<8x128xf32>
      %c0_12 = arith.constant 0 : index
      %c0_13 = arith.constant 0 : index
      %13 = vector.load %arg4[%c0_12, %c0_13] : memref<1x128xf32, #tpu.memory_space<vmem>>, vector<1x128xf32>
      %14 = vector.broadcast %13 : vector<1x128xf32> to vector<8x128xf32>
      %15 = arith.addf %12, %14 : vector<8x128xf32>
      %16 = arith.mulf %15, %15 : vector<8x128xf32>
      %cst_14 = arith.constant dense<0.000000e+00> : vector<8xf32>
      %17 = vector.multi_reduction <add>, %16, %cst_14 [1] : vector<8x128xf32> to vector<8xf32>
      %18 = vector.shape_cast %17 : vector<8xf32> to vector<8x1xf32>
      %cst_15 = arith.constant 1.000000e-16 : f32
      %19 = vector.broadcast %cst_15 : f32 to vector<8x1xf32>
      %20 = arith.maximumf %18, %19 : vector<8x1xf32>
      %21 = math.rsqrt %20 : vector<8x1xf32>
      %22 = vector.broadcast %21 : vector<8x1xf32> to vector<8x128xf32>
      %23 = arith.mulf %15, %22 : vector<8x128xf32>
      %c0_16 = arith.constant 0 : index
      %c0_17 = arith.constant 0 : index
      %24 = vector.load %arg5[%c0_16, %c0_17] : memref<8x128xf32, #tpu.memory_space<vmem>>, vector<8x128xf32>
      tpu.vector_store %arg5[%c0_16, %c0_17], %23 {strides = array<i32>} : memref<8x128xf32, #tpu.memory_space<vmem>>, vector<8x128xf32>,
    } else {
    }
    return
  }
  func.func @transform_0(%arg0: i32, %arg1: i32) -> (i32, i32) {
    %c0_i32 = arith.constant 0 : i32
    return %arg0, %arg1 : i32, i32
  }
  func.func @transform_1(%arg0: i32, %arg1: i32) -> (i32, i32) {
    %c0_i32 = arith.constant 0 : i32
    %c0_i32_0 = arith.constant 0 : i32
    return %arg1, %c0_i32 : i32, i32
  }
  func.func @transform_2(%arg0: i32, %arg1: i32) -> (i32, i32) {
    %c0_i32 = arith.constant 0 : i32
    %c0_i32_0 = arith.constant 0 : i32
    %c0_i32_1 = arith.constant 0 : i32
    return %c0_i32, %c0_i32_0 : i32, i32
  }
  func.func @transform_3(%arg0: i32, %arg1: i32) -> (i32, i32) {
    %c0_i32 = arith.constant 0 : i32
    %c0_i32_0 = arith.constant 0 : i32
    return %arg0, %c0_i32 : i32, i32
  }
}

</mosaic_0001>

<llo_original>
// kernel: tpu_custom_call.1
$region0: #{tpu_custom_call.1}
  #allocation0 [shape = 'u32[]', space=smem, size = 0x4, offset = 0x4, fixed_abs, tag = 'smem constant byte address 0x4 - core index']
  #allocation1 [shape = 'u32[72,128]{1,0:T(1,128)}', space=vmem, size = 0x9000, scoped, tag = 'internal scratch']
  %s0 = inlined_call_operand.hbm [shape: bf16[8,3072], index: 0, kind: input, shape index: {}]
  %s1 = inlined_call_operand.hbm [shape: bf16[3072,128], index: 1, kind: input, shape index: {}]
  %s2 = inlined_call_operand.vmem [shape: f32[1,128], index: 2, kind: input, shape index: {}]
  %s3 = inlined_call_operand.hbm [shape: f32[8,128], index: 3, kind: output, shape index: {}]
  %s4 = sld [smem:[#allocation0]]
  $region38: #{tpu_custom_call.1} parent=0
    _
  %s6 = ssub.s32 1, %s4
  %s7 = scalar_select 0, %s6, %s4
  $region1: #{tpu_custom_call.1} parent=0
    #allocation2 [shape = 'u8[49152]{0}', space=vmem, size = 0xc000, scoped, tag = 'input window, operand 0, single buffered']
    #allocation3 [shape = 's32[1]{0}', space=sflag, size = 0x4, scoped, tag = 'scoped memory for tpu_custom_call.1']
    #allocation4 [shape = 's32[1]{0}', space=sflag, size = 0x4, scoped, tag = 'scoped memory for tpu_custom_call.1']
    #allocation5 [shape = 'u8[786432]{0}', space=vmem, size = 0xc0000, scoped, tag = 'input window, operand 1, single buffered']
    #allocation6 [shape = 's32[1]{0}', space=sflag, size = 0x4, scoped, tag = 'scoped memory for tpu_custom_call.1']
    #allocation7 [shape = 'u8[4096]{0}', space=vmem, size = 0x1000, scoped, tag = 'output window, operand 0, single buffered']
    %8 = vsyncpa [#allocation3], 0
    %9 = vsyncpa [#allocation6], 0
    %10 = vsyncpa [#allocation4], 0
    // Predicated region
    $region2: #{tpu_custom_call.1} parent=1 // pred_check
      _
    $region3: #{tpu_custom_call.1} parent=1 // pred_check_branch
      %12 = sbr.rel (0) target = $region5
    $region4: #{tpu_custom_call.1} parent=1 // pred_region
      %14 = vsyncadd [#allocation3], 0
      %s16 = sshll.u32 %s0, 4
      %s17 = int_to_ptr.hbm [resolvable:$true] %s16
      %s18 = sshll.u32 [#allocation2], 4
      %s19 = int_to_ptr.vmem [resolvable:$true] %s18
      %21 = dma.hbm_to_vmem [thread:$0]  %s17, 1536, %s19, [#allocation3]
    $region5: #{tpu_custom_call.1} parent=1 // pred_fallthru
      _
    // Predicated region
    $region6: #{tpu_custom_call.1} parent=1 // pred_check
      _
    $region7: #{tpu_custom_call.1} parent=1 // pred_check_branch
      %23 = sbr.rel (0) target = $region9
    $region8: #{tpu_custom_call.1} parent=1 // pred_region
      %25 = vsyncadd [#allocation6], 0
      %s26 = sshll.u32 %s1, 4
      %s27 = int_to_ptr.hbm [resolvable:$true] %s26
      %s28 = sshll.u32 [#allocation5], 4
      %s29 = int_to_ptr.vmem [resolvable:$true] %s28
      %34 = dma.hbm_to_vmem [thread:$0]  %s27, 24576, %s29, [#allocation6], 64, 64, 4
    $region9: #{tpu_custom_call.1} parent=1 // pred_fallthru
      _
    // Predicated region
    $region10: #{tpu_custom_call.1} parent=1 // pred_check
      _
    $region11: #{tpu_custom_call.1} parent=1 // pred_check_branch
      %36 = sbr.rel (0) target = $region13
    $region12: #{tpu_custom_call.1} parent=1 // pred_region
      _
    $region13: #{tpu_custom_call.1} parent=1 // pred_fallthru
      _
    // Predicated region
    $region14: #{tpu_custom_call.1} parent=1 // pred_check
      _
    $region15: #{tpu_custom_call.1} parent=1 // pred_check_branch
      %38 = sbr.rel (0) target = $region17
    $region16: #{tpu_custom_call.1} parent=1 // pred_region
      %40 = dma.done [#allocation3], 1536
    $region17: #{tpu_custom_call.1} parent=1 // pred_fallthru
      _
    // Predicated region
    $region18: #{tpu_custom_call.1} parent=1 // pred_check
      _
    $region19: #{tpu_custom_call.1} parent=1 // pred_check_branch
      %42 = sbr.rel (0) target = $region21
    $region20: #{tpu_custom_call.1} parent=1 // pred_region
      %44 = dma.done [#allocation6], 24576
    $region21: #{tpu_custom_call.1} parent=1 // pred_fallthru
      _
    %p45 = scmp.eq.s32.totalorder 0, 0
    // Predicated region
    $region22: #{tpu_custom_call.1} parent=1 // pred_check
      %p46 = pneg %p45
    $region23: #{tpu_custom_call.1} parent=1 // pred_check_branch
      %48 = sbr.rel (%p46) target = $region25
    $region24: #{tpu_custom_call.1} parent=1 // pred_region
      %49 = vst [vmem:[#allocation7] sm:$0xff] 0.0
    $region25: #{tpu_custom_call.1} parent=1 // pred_fallthru
      _
    %v50 = vld [vmem:[#allocation7] sm:$0xff]
    %v51 = vld [vmem:[#allocation2] sm:$0xff]
    %v52 = vld [vmem:[#allocation2 + $0x8] sm:$0xff]
    %v53 = vld [vmem:[#allocation2 + $0x10] sm:$0xff]
    %v54 = vld [vmem:[#allocation2 + $0x18] sm:$0xff]
    %v55 = vld [vmem:[#allocation2 + $0x20] sm:$0xff]
    %v56 = vld [vmem:[#allocation2 + $0x28] sm:$0xff]
    %v57 = vld [vmem:[#allocation2 + $0x30] sm:$0xff]
    %v58 = vld [vmem:[#allocation2 + $0x38] sm:$0xff]
    %v59 = vld [vmem:[#allocation2 + $0x40] sm:$0xff]
    %v60 = vld [vmem:[#allocation2 + $0x48] sm:$0xff]
    %v61 = vld [vmem:[#allocation2 + $0x50] sm:$0xff]
    %v62 = vld [vmem:[#allocation2 + $0x58] sm:$0xff]
    %v63 = vld [vmem:[#allocation5] sm:$0xf]
    %v64 = vld [vmem:[#allocation5 + $0x4] sm:$0xf]
    %v65 = vld [vmem:[#allocation5 + $0x8] sm:$0xf]
    %v66 = vld [vmem:[#allocation5 + $0xc] sm:$0xf]
    %v67 = vld [vmem:[#allocation5 + $0x10] sm:$0xf]
    %v68 = vld [vmem:[#allocation5 + $0x14] sm:$0xf]
    %v69 = vld [vmem:[#allocation5 + $0x18] sm:$0xf]
    %v70 = vld [vmem:[#allocation5 + $0x1c] sm:$0xf]
    %v71 = vld [vmem:[#allocation5 + $0x20] sm:$0xf]
    %v72 = vld [vmem:[#allocation5 + $0x24] sm:$0xf]
    %v73 = vld [vmem:[#allocation5 + $0x28] sm:$0xf]
    %v74 = vld [vmem:[#allocation5 + $0x2c] sm:$0xf]
    %v75 = vld [vmem:[#allocation5 + $0x30] sm:$0xf]
    %v76 = vld [vmem:[#allocation5 + $0x34] sm:$0xf]
    %v77 = vld [vmem:[#allocation5 + $0x38] sm:$0xf]
    %v78 = vld [vmem:[#allocation5 + $0x3c] sm:$0xf]
    %v79 = vld [vmem:[#allocation5 + $0x40] sm:$0xf]
    %v80 = vld [vmem:[#allocation5 + $0x44] sm:$0xf]
    %v81 = vld [vmem:[#allocation5 + $0x48] sm:$0xf]
    %v82 = vld [vmem:[#allocation5 + $0x4c] sm:$0xf]
    %v83 = vld [vmem:[#allocation5 + $0x50] sm:$0xf]
    %v84 = vld [vmem:[#allocation5 + $0x54] sm:$0xf]
    %v85 = vld [vmem:[#allocation5 + $0x58] sm:$0xf]
    %v86 = vld [vmem:[#allocation5 + $0x5c] sm:$0xf]
    %v87 = vld [vmem:[#allocation5 + $0x60] sm:$0xf]
    %v88 = vld [vmem:[#allocation5 + $0x64] sm:$0xf]
    %v89 = vld [vmem:[#allocation5 + $0x68] sm:$0xf]
    %v90 = vld [vmem:[#allocation5 + $0x6c] sm:$0xf]
    %v91 = vld [vmem:[#allocation5 + $0x70] sm:$0xf]
    %v92 = vld [vmem:[#allocation5 + $0x74] sm:$0xf]
    %v93 = vld [vmem:[#allocation5 + $0x78] sm:$0xf]
    %v94 = vld [vmem:[#allocation5 + $0x7c] sm:$0xf]
    %v95 = vld [vmem:[#allocation5 + $0x80] sm:$0xf]
    %v96 = vld [vmem:[#allocation5 + $0x84] sm:$0xf]
    %v97 = vld [vmem:[#allocation5 + $0x88] sm:$0xf]
    %v98 = vld [vmem:[#allocation5 + $0x8c] sm:$0xf]
    %v99 = vld [vmem:[#allocation5 + $0x90] sm:$0xf]
    %v100 = vld [vmem:[#allocation5 + $0x94] sm:$0xf]
    %v101 = vld [vmem:[#allocation5 + $0x98] sm:$0xf]
    %v102 = vld [vmem:[#allocation5 + $0x9c] sm:$0xf]
    %v103 = vld [vmem:[#allocation5 + $0xa0] sm:$0xf]
    %v104 = vld [vmem:[#allocation5 + $0xa4] sm:$0xf]
    %v105 = vld [vmem:[#allocation5 + $0xa8] sm:$0xf]
    %v106 = vld [vmem:[#allocation5 + $0xac] sm:$0xf]
    %v107 = vld [vmem:[#allocation5 + $0xb0] sm:$0xf]
    %v108 = vld [vmem:[#allocation5 + $0xb4] sm:$0xf]
    %v109 = vld [vmem:[#allocation5 + $0xb8] sm:$0xf]
    %v110 = vld [vmem:[#allocation5 + $0xbc] sm:$0xf]
    %v111 = vld [vmem:[#allocation5 + $0xc0] sm:$0xf]
    %v112 = vld [vmem:[#allocation5 + $0xc4] sm:$0xf]
    %v113 = vld [vmem:[#allocation5 + $0xc8] sm:$0xf]
    %v114 = vld [vmem:[#allocation5 + $0xcc] sm:$0xf]
    %v115 = vld [vmem:[#allocation5 + $0xd0] sm:$0xf]
    %v116 = vld [vmem:[#allocation5 + $0xd4] sm:$0xf]
    %v117 = vld [vmem:[#allocation5 + $0xd8] sm:$0xf]
    %v118 = vld [vmem:[#allocation5 + $0xdc] sm:$0xf]
    %v119 = vld [vmem:[#allocation5 + $0xe0] sm:$0xf]
    %v120 = vld [vmem:[#allocation5 + $0xe4] sm:$0xf]
    %v121 = vld [vmem:[#allocation5 + $0xe8] sm:$0xf]
    %v122 = vld [vmem:[#allocation5 + $0xec] sm:$0xf]
    %v123 = vld [vmem:[#allocation5 + $0xf0] sm:$0xf]
    %v124 = vld [vmem:[#allocation5 + $0xf4] sm:$0xf]
    %v125 = vld [vmem:[#allocation5 + $0xf8] sm:$0xf]
    %v126 = vld [vmem:[#allocation5 + $0xfc] sm:$0xf]
    %v127 = vld [vmem:[#allocation5 + $0x100] sm:$0xf]
    %v128 = vld [vmem:[#allocation5 + $0x104] sm:$0xf]
    %v129 = vld [vmem:[#allocation5 + $0x108] sm:$0xf]
    %v130 = vld [vmem:[#allocation5 + $0x10c] sm:$0xf]
    %v131 = vld [vmem:[#allocation5 + $0x110] sm:$0xf]
    %v132 = vld [vmem:[#allocation5 + $0x114] sm:$0xf]
    %v133 = vld [vmem:[#allocation5 + $0x118] sm:$0xf]
    %v134 = vld [vmem:[#allocation5 + $0x11c] sm:$0xf]
    %v135 = vld [vmem:[#allocation5 + $0x120] sm:$0xf]
    %v136 = vld [vmem:[#allocation5 + $0x124] sm:$0xf]
    %v137 = vld [vmem:[#allocation5 + $0x128] sm:$0xf]
    %v138 = vld [vmem:[#allocation5 + $0x12c] sm:$0xf]
    %v139 = vld [vmem:[#allocation5 + $0x130] sm:$0xf]
    %v140 = vld [vmem:[#allocation5 + $0x134] sm:$0xf]
    %v141 = vld [vmem:[#allocation5 + $0x138] sm:$0xf]
    %v142 = vld [vmem:[#allocation5 + $0x13c] sm:$0xf]
    %v143 = vld [vmem:[#allocation5 + $0x140] sm:$0xf]
    %v144 = vld [vmem:[#allocation5 + $0x144] sm:$0xf]
    %v145 = vld [vmem:[#allocation5 + $0x148] sm:$0xf]
    %v146 = vld [vmem:[#allocation5 + $0x14c] sm:$0xf]
    %v147 = vld [vmem:[#allocation5 + $0x150] sm:$0xf]
    %v148 = vld [vmem:[#allocation5 + $0x154] sm:$0xf]
    %v149 = vld [vmem:[#allocation5 + $0x158] sm:$0xf]
    %v150 = vld [vmem:[#allocation5 + $0x15c] sm:$0xf]
    %v151 = vld [vmem:[#allocation5 + $0x160] sm:$0xf]
    %v152 = vld [vmem:[#allocation5 + $0x164] sm:$0xf]
    %v153 = vld [vmem:[#allocation5 + $0x168] sm:$0xf]
    %v154 = vld [vmem:[#allocation5 + $0x16c] sm:$0xf]
    %v155 = vld [vmem:[#allocation5 + $0x170] sm:$0xf]
    %v156 = vld [vmem:[#allocation5 + $0x174] sm:$0xf]
    %v157 = vld [vmem:[#allocation5 + $0x178] sm:$0xf]
    %v158 = vld [vmem:[#allocation5 + $0x17c] sm:$0xf]
    %v159 = vld [vmem:[#allocation5 + $0x180] sm:$0xf]
    %v160 = vld [vmem:[#allocation5 + $0x184] sm:$0xf]
    %v161 = vld [vmem:[#allocation5 + $0x188] sm:$0xf]
    %v162 = vld [vmem:[#allocation5 + $0x18c] sm:$0xf]
    %v163 = vld [vmem:[#allocation5 + $0x190] sm:$0xf]
    %v164 = vld [vmem:[#allocation5 + $0x194] sm:$0xf]
    %v165 = vld [vmem:[#allocation5 + $0x198] sm:$0xf]
    %v166 = vld [vmem:[#allocation5 + $0x19c] sm:$0xf]
    %v167 = vld [vmem:[#allocation5 + $0x1a0] sm:$0xf]
    %v168 = vld [vmem:[#allocation5 + $0x1a4] sm:$0xf]
    %v169 = vld [vmem:[#allocation5 + $0x1a8] sm:$0xf]
    %v170 = vld [vmem:[#allocation5 + $0x1ac] sm:$0xf]
    %v171 = vld [vmem:[#allocation5 + $0x1b0] sm:$0xf]
    %v172 = vld [vmem:[#allocation5 + $0x1b4] sm:$0xf]
    %v173 = vld [vmem:[#allocation5 + $0x1b8] sm:$0xf]
    %v174 = vld [vmem:[#allocation5 + $0x1bc] sm:$0xf]
    %v175 = vld [vmem:[#allocation5 + $0x1c0] sm:$0xf]
    %v176 = vld [vmem:[#allocation5 + $0x1c4] sm:$0xf]
    %v177 = vld [vmem:[#allocation5 + $0x1c8] sm:$0xf]
    %v178 = vld [vmem:[#allocation5 + $0x1cc] sm:$0xf]
    %v179 = vld [vmem:[#allocation5 + $0x1d0] sm:$0xf]
    %v180 = vld [vmem:[#allocation5 + $0x1d4] sm:$0xf]
    %v181 = vld [vmem:[#allocation5 + $0x1d8] sm:$0xf]
    %v182 = vld [vmem:[#allocation5 + $0x1dc] sm:$0xf]
    %v183 = vld [vmem:[#allocation5 + $0x1e0] sm:$0xf]
    %v184 = vld [vmem:[#allocation5 + $0x1e4] sm:$0xf]
    %v185 = vld [vmem:[#allocation5 + $0x1e8] sm:$0xf]
    %v186 = vld [vmem:[#allocation5 + $0x1ec] sm:$0xf]
    %v187 = vld [vmem:[#allocation5 + $0x1f0] sm:$0xf]
    %v188 = vld [vmem:[#allocation5 + $0x1f4] sm:$0xf]
    %v189 = vld [vmem:[#allocation5 + $0x1f8] sm:$0xf]
    %v190 = vld [vmem:[#allocation5 + $0x1fc] sm:$0xf]
    %v191 = vld [vmem:[#allocation5 + $0x200] sm:$0xf]
    %v192 = vld [vmem:[#allocation5 + $0x204] sm:$0xf]
    %v193 = vld [vmem:[#allocation5 + $0x208] sm:$0xf]
    %v194 = vld [vmem:[#allocation5 + $0x20c] sm:$0xf]
    %v195 = vld [vmem:[#allocation5 + $0x210] sm:$0xf]
    %v196 = vld [vmem:[#allocation5 + $0x214] sm:$0xf]
    %v197 = vld [vmem:[#allocation5 + $0x218] sm:$0xf]
    %v198 = vld [vmem:[#allocation5 + $0x21c] sm:$0xf]
    %v199 = vld [vmem:[#allocation5 + $0x220] sm:$0xf]
    %v200 = vld [vmem:[#allocation5 + $0x224] sm:$0xf]
    %v201 = vld [vmem:[#allocation5 + $0x228] sm:$0xf]
    %v202 = vld [vmem:[#allocation5 + $0x22c] sm:$0xf]
    %v203 = vld [vmem:[#allocation5 + $0x230] sm:$0xf]
    %v204 = vld [vmem:[#allocation5 + $0x234] sm:$0xf]
    %v205 = vld [vmem:[#allocation5 + $0x238] sm:$0xf]
    %v206 = vld [vmem:[#allocation5 + $0x23c] sm:$0xf]
    %v207 = vld [vmem:[#allocation5 + $0x240] sm:$0xf]
    %v208 = vld [vmem:[#allocation5 + $0x244] sm:$0xf]
    %v209 = vld [vmem:[#allocation5 + $0x248] sm:$0xf]
    %v210 = vld [vmem:[#allocation5 + $0x24c] sm:$0xf]
    %v211 = vld [vmem:[#allocation5 + $0x250] sm:$0xf]
    %v212 = vld [vmem:[#allocation5 + $0x254] sm:$0xf]
    %v213 = vld [vmem:[#allocation5 + $0x258] sm:$0xf]
    %v214 = vld [vmem:[#allocation5 + $0x25c] sm:$0xf]
    %v215 = vld [vmem:[#allocation5 + $0x260] sm:$0xf]
    %v216 = vld [vmem:[#allocation5 + $0x264] sm:$0xf]
    %v217 = vld [vmem:[#allocation5 + $0x268] sm:$0xf]
    %v218 = vld [vmem:[#allocation5 + $0x26c] sm:$0xf]
    %v219 = vld [vmem:[#allocation5 + $0x270] sm:$0xf]
    %v220 = vld [vmem:[#allocation5 + $0x274] sm:$0xf]
    %v221 = vld [vmem:[#allocation5 + $0x278] sm:$0xf]
    %v222 = vld [vmem:[#allocation5 + $0x27c] sm:$0xf]
    %v223 = vld [vmem:[#allocation5 + $0x280] sm:$0xf]
    %v224 = vld [vmem:[#allocation5 + $0x284] sm:$0xf]
    %v225 = vld [vmem:[#allocation5 + $0x288] sm:$0xf]
    %v226 = vld [vmem:[#allocation5 + $0x28c] sm:$0xf]
    %v227 = vld [vmem:[#allocation5 + $0x290] sm:$0xf]
    %v228 = vld [vmem:[#allocation5 + $0x294] sm:$0xf]
    %v229 = vld [vmem:[#allocation5 + $0x298] sm:$0xf]
    %v230 = vld [vmem:[#allocation5 + $0x29c] sm:$0xf]
    %v231 = vld [vmem:[#allocation5 + $0x2a0] sm:$0xf]
    %v232 = vld [vmem:[#allocation5 + $0x2a4] sm:$0xf]
    %v233 = vld [vmem:[#allocation5 + $0x2a8] sm:$0xf]
    %v234 = vld [vmem:[#allocation5 + $0x2ac] sm:$0xf]
    %v235 = vld [vmem:[#allocation5 + $0x2b0] sm:$0xf]
    %v236 = vld [vmem:[#allocation5 + $0x2b4] sm:$0xf]
    %v237 = vld [vmem:[#allocation5 + $0x2b8] sm:$0xf]
    %v238 = vld [vmem:[#allocation5 + $0x2bc] sm:$0xf]
    %v239 = vld [vmem:[#allocation5 + $0x2c0] sm:$0xf]
    %v240 = vld [vmem:[#allocation5 + $0x2c4] sm:$0xf]
    %v241 = vld [vmem:[#allocation5 + $0x2c8] sm:$0xf]
    %v242 = vld [vmem:[#allocation5 + $0x2cc] sm:$0xf]
    %v243 = vld [vmem:[#allocation5 + $0x2d0] sm:$0xf]
    %v244 = vld [vmem:[#allocation5 + $0x2d4] sm:$0xf]
    %v245 = vld [vmem:[#allocation5 + $0x2d8] sm:$0xf]
    %v246 = vld [vmem:[#allocation5 + $0x2dc] sm:$0xf]
    %v247 = vld [vmem:[#allocation5 + $0x2e0] sm:$0xf]
    %v248 = vld [vmem:[#allocation5 + $0x2e4] sm:$0xf]
    %v249 = vld [vmem:[#allocation5 + $0x2e8] sm:$0xf]
    %v250 = vld [vmem:[#allocation5 + $0x2ec] sm:$0xf]
    %v251 = vld [vmem:[#allocation5 + $0x2f0] sm:$0xf]
    %v252 = vld [vmem:[#allocation5 + $0x2f4] sm:$0xf]
    %v253 = vld [vmem:[#allocation5 + $0x2f8] sm:$0xf]
    %v254 = vld [vmem:[#allocation5 + $0x2fc] sm:$0xf]
    %v255 = vld [vmem:[#allocation5 + $0x300] sm:$0xf]
    %v256 = vld [vmem:[#allocation5 + $0x304] sm:$0xf]
    %v257 = vld [vmem:[#allocation5 + $0x308] sm:$0xf]
    %v258 = vld [vmem:[#allocation5 + $0x30c] sm:$0xf]
    %v259 = vld [vmem:[#allocation5 + $0x310] sm:$0xf]
    %v260 = vld [vmem:[#allocation5 + $0x314] sm:$0xf]
    %v261 = vld [vmem:[#allocation5 + $0x318] sm:$0xf]
    %v262 = vld [vmem:[#allocation5 + $0x31c] sm:$0xf]
    %v263 = vld [vmem:[#allocation5 + $0x320] sm:$0xf]
    %v264 = vld [vmem:[#allocation5 + $0x324] sm:$0xf]
    %v265 = vld [vmem:[#allocation5 + $0x328] sm:$0xf]
    %v266 = vld [vmem:[#allocation5 + $0x32c] sm:$0xf]
    %v267 = vld [vmem:[#allocation5 + $0x330] sm:$0xf]
    %v268 = vld [vmem:[#allocation5 + $0x334] sm:$0xf]
    %v269 = vld [vmem:[#allocation5 + $0x338] sm:$0xf]
    %v270 = vld [vmem:[#allocation5 + $0x33c] sm:$0xf]
    %v271 = vld [vmem:[#allocation5 + $0x340] sm:$0xf]
    %v272 = vld [vmem:[#allocation5 + $0x344] sm:$0xf]
    %v273 = vld [vmem:[#allocation5 + $0x348] sm:$0xf]
    %v274 = vld [vmem:[#allocation5 + $0x34c] sm:$0xf]
    %v275 = vld [vmem:[#allocation5 + $0x350] sm:$0xf]
    %v276 = vld [vmem:[#allocation5 + $0x354] sm:$0xf]
    %v277 = vld [vmem:[#allocation5 + $0x358] sm:$0xf]
    %v278 = vld [vmem:[#allocation5 + $0x35c] sm:$0xf]
    %v279 = vld [vmem:[#allocation5 + $0x360] sm:$0xf]
    %v280 = vld [vmem:[#allocation5 + $0x364] sm:$0xf]
    %v281 = vld [vmem:[#allocation5 + $0x368] sm:$0xf]
    %v282 = vld [vmem:[#allocation5 + $0x36c] sm:$0xf]
    %v283 = vld [vmem:[#allocation5 + $0x370] sm:$0xf]
    %v284 = vld [vmem:[#allocation5 + $0x374] sm:$0xf]
    %v285 = vld [vmem:[#allocation5 + $0x378] sm:$0xf]
    %v286 = vld [vmem:[#allocation5 + $0x37c] sm:$0xf]
    %v287 = vld [vmem:[#allocation5 + $0x380] sm:$0xf]
    %v288 = vld [vmem:[#allocation5 + $0x384] sm:$0xf]
    %v289 = vld [vmem:[#allocation5 + $0x388] sm:$0xf]
    %v290 = vld [vmem:[#allocation5 + $0x38c] sm:$0xf]
    %v291 = vld [vmem:[#allocation5 + $0x390] sm:$0xf]
    %v292 = vld [vmem:[#allocation5 + $0x394] sm:$0xf]
    %v293 = vld [vmem:[#allocation5 + $0x398] sm:$0xf]
    %v294 = vld [vmem:[#allocation5 + $0x39c] sm:$0xf]
    %v295 = vld [vmem:[#allocation5 + $0x3a0] sm:$0xf]
    %v296 = vld [vmem:[#allocation5 + $0x3a4] sm:$0xf]
    %v297 = vld [vmem:[#allocation5 + $0x3a8] sm:$0xf]
    %v298 = vld [vmem:[#allocation5 + $0x3ac] sm:$0xf]
    %v299 = vld [vmem:[#allocation5 + $0x3b0] sm:$0xf]
    %v300 = vld [vmem:[#allocation5 + $0x3b4] sm:$0xf]
    %v301 = vld [vmem:[#allocation5 + $0x3b8] sm:$0xf]
    %v302 = vld [vmem:[#allocation5 + $0x3bc] sm:$0xf]
    %v303 = vld [vmem:[#allocation5 + $0x3c0] sm:$0xf]
    %v304 = vld [vmem:[#allocation5 + $0x3c4] sm:$0xf]
    %v305 = vld [vmem:[#allocation5 + $0x3c8] sm:$0xf]
    %v306 = vld [vmem:[#allocation5 + $0x3cc] sm:$0xf]
    %v307 = vld [vmem:[#allocation5 + $0x3d0] sm:$0xf]
    %v308 = vld [vmem:[#allocation5 + $0x3d4] sm:$0xf]
    %v309 = vld [vmem:[#allocation5 + $0x3d8] sm:$0xf]
    %v310 = vld [vmem:[#allocation5 + $0x3dc] sm:$0xf]
    %v311 = vld [vmem:[#allocation5 + $0x3e0] sm:$0xf]
    %v312 = vld [vmem:[#allocation5 + $0x3e4] sm:$0xf]
    %v313 = vld [vmem:[#allocation5 + $0x3e8] sm:$0xf]
    %v314 = vld [vmem:[#allocation5 + $0x3ec] sm:$0xf]
    %v315 = vld [vmem:[#allocation5 + $0x3f0] sm:$0xf]
    %v316 = vld [vmem:[#allocation5 + $0x3f4] sm:$0xf]
    %v317 = vld [vmem:[#allocation5 + $0x3f8] sm:$0xf]
    %v318 = vld [vmem:[#allocation5 + $0x3fc] sm:$0xf]
    %v319 = vld [vmem:[#allocation5 + $0x400] sm:$0xf]
    %v320 = vld [vmem:[#allocation5 + $0x404] sm:$0xf]
    %v321 = vld [vmem:[#allocation5 + $0x408] sm:$0xf]
    %v322 = vld [vmem:[#allocation5 + $0x40c] sm:$0xf]
    %v323 = vld [vmem:[#allocation5 + $0x410] sm:$0xf]
    %v324 = vld [vmem:[#allocation5 + $0x414] sm:$0xf]
    %v325 = vld [vmem:[#allocation5 + $0x418] sm:$0xf]
    %v326 = vld [vmem:[#allocation5 + $0x41c] sm:$0xf]
    %v327 = vld [vmem:[#allocation5 + $0x420] sm:$0xf]
    %v328 = vld [vmem:[#allocation5 + $0x424] sm:$0xf]
    %v329 = vld [vmem:[#allocation5 + $0x428] sm:$0xf]
    %v330 = vld [vmem:[#allocation5 + $0x42c] sm:$0xf]
    %v331 = vld [vmem:[#allocation5 + $0x430] sm:$0xf]
    %v332 = vld [vmem:[#allocation5 + $0x434] sm:$0xf]
    %v333 = vld [vmem:[#allocation5 + $0x438] sm:$0xf]
    %v334 = vld [vmem:[#allocation5 + $0x43c] sm:$0xf]
    %v335 = vld [vmem:[#allocation5 + $0x440] sm:$0xf]
    %v336 = vld [vmem:[#allocation5 + $0x444] sm:$0xf]
    %v337 = vld [vmem:[#allocation5 + $0x448] sm:$0xf]
    %v338 = vld [vmem:[#allocation5 + $0x44c] sm:$0xf]
    %v339 = vld [vmem:[#allocation5 + $0x450] sm:$0xf]
    %v340 = vld [vmem:[#allocation5 + $0x454] sm:$0xf]
    %v341 = vld [vmem:[#allocation5 + $0x458] sm:$0xf]
    %v342 = vld [vmem:[#allocation5 + $0x45c] sm:$0xf]
    %v343 = vld [vmem:[#allocation5 + $0x460] sm:$0xf]
    %v344 = vld [vmem:[#allocation5 + $0x464] sm:$0xf]
    %v345 = vld [vmem:[#allocation5 + $0x468] sm:$0xf]
    %v346 = vld [vmem:[#allocation5 + $0x46c] sm:$0xf]
    %v347 = vld [vmem:[#allocation5 + $0x470] sm:$0xf]
    %v348 = vld [vmem:[#allocation5 + $0x474] sm:$0xf]
    %v349 = vld [vmem:[#allocation5 + $0x478] sm:$0xf]
    %v350 = vld [vmem:[#allocation5 + $0x47c] sm:$0xf]
    %v351 = vld [vmem:[#allocation5 + $0x480] sm:$0xf]
    %v352 = vld [vmem:[#allocation5 + $0x484] sm:$0xf]
    %v353 = vld [vmem:[#allocation5 + $0x488] sm:$0xf]
    %v354 = vld [vmem:[#allocation5 + $0x48c] sm:$0xf]
    %v355 = vld [vmem:[#allocation5 + $0x490] sm:$0xf]
    %v356 = vld [vmem:[#allocation5 + $0x494] sm:$0xf]
    %v357 = vld [vmem:[#allocation5 + $0x498] sm:$0xf]
    %v358 = vld [vmem:[#allocation5 + $0x49c] sm:$0xf]
    %v359 = vld [vmem:[#allocation5 + $0x4a0] sm:$0xf]
    %v360 = vld [vmem:[#allocation5 + $0x4a4] sm:$0xf]
    %v361 = vld [vmem:[#allocation5 + $0x4a8] sm:$0xf]
    %v362 = vld [vmem:[#allocation5 + $0x4ac] sm:$0xf]
    %v363 = vld [vmem:[#allocation5 + $0x4b0] sm:$0xf]
    %v364 = vld [vmem:[#allocation5 + $0x4b4] sm:$0xf]
    %v365 = vld [vmem:[#allocation5 + $0x4b8] sm:$0xf]
    %v366 = vld [vmem:[#allocation5 + $0x4bc] sm:$0xf]
    %v367 = vld [vmem:[#allocation5 + $0x4c0] sm:$0xf]
    %v368 = vld [vmem:[#allocation5 + $0x4c4] sm:$0xf]
    %v369 = vld [vmem:[#allocation5 + $0x4c8] sm:$0xf]
    %v370 = vld [vmem:[#allocation5 + $0x4cc] sm:$0xf]
    %v371 = vld [vmem:[#allocation5 + $0x4d0] sm:$0xf]
    %v372 = vld [vmem:[#allocation5 + $0x4d4] sm:$0xf]
    %v373 = vld [vmem:[#allocation5 + $0x4d8] sm:$0xf]
    %v374 = vld [vmem:[#allocation5 + $0x4dc] sm:$0xf]
    %v375 = vld [vmem:[#allocation5 + $0x4e0] sm:$0xf]
    %v376 = vld [vmem:[#allocation5 + $0x4e4] sm:$0xf]
    %v377 = vld [vmem:[#allocation5 + $0x4e8] sm:$0xf]
    %v378 = vld [vmem:[#allocation5 + $0x4ec] sm:$0xf]
    %v379 = vld [vmem:[#allocation5 + $0x4f0] sm:$0xf]
    %v380 = vld [vmem:[#allocation5 + $0x4f4] sm:$0xf]
    %v381 = vld [vmem:[#allocation5 + $0x4f8] sm:$0xf]
    %v382 = vld [vmem:[#allocation5 + $0x4fc] sm:$0xf]
    %v383 = vld [vmem:[#allocation5 + $0x500] sm:$0xf]
    %v384 = vld [vmem:[#allocation5 + $0x504] sm:$0xf]
    %v385 = vld [vmem:[#allocation5 + $0x508] sm:$0xf]
    %v386 = vld [vmem:[#allocation5 + $0x50c] sm:$0xf]
    %v387 = vld [vmem:[#allocation5 + $0x510] sm:$0xf]
    %v388 = vld [vmem:[#allocation5 + $0x514] sm:$0xf]
    %v389 = vld [vmem:[#allocation5 + $0x518] sm:$0xf]
    %v390 = vld [vmem:[#allocation5 + $0x51c] sm:$0xf]
    %v391 = vld [vmem:[#allocation5 + $0x520] sm:$0xf]
    %v392 = vld [vmem:[#allocation5 + $0x524] sm:$0xf]
    %v393 = vld [vmem:[#allocation5 + $0x528] sm:$0xf]
    %v394 = vld [vmem:[#allocation5 + $0x52c] sm:$0xf]
    %v395 = vld [vmem:[#allocation5 + $0x530] sm:$0xf]
    %v396 = vld [vmem:[#allocation5 + $0x534] sm:$0xf]
    %v397 = vld [vmem:[#allocation5 + $0x538] sm:$0xf]
    %v398 = vld [vmem:[#allocation5 + $0x53c] sm:$0xf]
    %v399 = vld [vmem:[#allocation5 + $0x540] sm:$0xf]
    %v400 = vld [vmem:[#allocation5 + $0x544] sm:$0xf]
    %v401 = vld [vmem:[#allocation5 + $0x548] sm:$0xf]
    %v402 = vld [vmem:[#allocation5 + $0x54c] sm:$0xf]
    %v403 = vld [vmem:[#allocation5 + $0x550] sm:$0xf]
    %v404 = vld [vmem:[#allocation5 + $0x554] sm:$0xf]
    %v405 = vld [vmem:[#allocation5 + $0x558] sm:$0xf]
    %v406 = vld [vmem:[#allocation5 + $0x55c] sm:$0xf]
    %v407 = vld [vmem:[#allocation5 + $0x560] sm:$0xf]
    %v408 = vld [vmem:[#allocation5 + $0x564] sm:$0xf]
    %v409 = vld [vmem:[#allocation5 + $0x568] sm:$0xf]
    %v410 = vld [vmem:[#allocation5 + $0x56c] sm:$0xf]
    %v411 = vld [vmem:[#allocation5 + $0x570] sm:$0xf]
    %v412 = vld [vmem:[#allocation5 + $0x574] sm:$0xf]
    %v413 = vld [vmem:[#allocation5 + $0x578] sm:$0xf]
    %v414 = vld [vmem:[#allocation5 + $0x57c] sm:$0xf]
    %v415 = vld [vmem:[#allocation5 + $0x580] sm:$0xf]
    %v416 = vld [vmem:[#allocation5 + $0x584] sm:$0xf]
    %v417 = vld [vmem:[#allocation5 + $0x588] sm:$0xf]
    %v418 = vld [vmem:[#allocation5 + $0x58c] sm:$0xf]
    %v419 = vld [vmem:[#allocation5 + $0x590] sm:$0xf]
    %v420 = vld [vmem:[#allocation5 + $0x594] sm:$0xf]
    %v421 = vld [vmem:[#allocation5 + $0x598] sm:$0xf]
    %v422 = vld [vmem:[#allocation5 + $0x59c] sm:$0xf]
    %v423 = vld [vmem:[#allocation5 + $0x5a0] sm:$0xf]
    %v424 = vld [vmem:[#allocation5 + $0x5a4] sm:$0xf]
    %v425 = vld [vmem:[#allocation5 + $0x5a8] sm:$0xf]
    %v426 = vld [vmem:[#allocation5 + $0x5ac] sm:$0xf]
    %v427 = vld [vmem:[#allocation5 + $0x5b0] sm:$0xf]
    %v428 = vld [vmem:[#allocation5 + $0x5b4] sm:$0xf]
    %v429 = vld [vmem:[#allocation5 + $0x5b8] sm:$0xf]
    %v430 = vld [vmem:[#allocation5 + $0x5bc] sm:$0xf]
    %v431 = vld [vmem:[#allocation5 + $0x5c0] sm:$0xf]
    %v432 = vld [vmem:[#allocation5 + $0x5c4] sm:$0xf]
    %v433 = vld [vmem:[#allocation5 + $0x5c8] sm:$0xf]
    %v434 = vld [vmem:[#allocation5 + $0x5cc] sm:$0xf]
    %v435 = vld [vmem:[#allocation5 + $0x5d0] sm:$0xf]
    %v436 = vld [vmem:[#allocation5 + $0x5d4] sm:$0xf]
    %v437 = vld [vmem:[#allocation5 + $0x5d8] sm:$0xf]
    %v438 = vld [vmem:[#allocation5 + $0x5dc] sm:$0xf]
    %v439 = vld [vmem:[#allocation5 + $0x5e0] sm:$0xf]
    %v440 = vld [vmem:[#allocation5 + $0x5e4] sm:$0xf]
    %v441 = vld [vmem:[#allocation5 + $0x5e8] sm:$0xf]
    %v442 = vld [vmem:[#allocation5 + $0x5ec] sm:$0xf]
    %v443 = vld [vmem:[#allocation5 + $0x5f0] sm:$0xf]
    %v444 = vld [vmem:[#allocation5 + $0x5f4] sm:$0xf]
    %v445 = vld [vmem:[#allocation5 + $0x5f8] sm:$0xf]
    %v446 = vld [vmem:[#allocation5 + $0x5fc] sm:$0xf]
    %v459 = vunpack.c.l.b16 %v51
    %v460 = vunpack.c.h.b16 %v51
    %v461 = vunpack.c.l.b16 %v52
    %v462 = vunpack.c.h.b16 %v52
    %v463 = vunpack.c.l.b16 %v53
    %v464 = vunpack.c.h.b16 %v53
    %v465 = vunpack.c.l.b16 %v54
    %v466 = vunpack.c.h.b16 %v54
    %v467 = vunpack.c.l.b16 %v55
    %v468 = vunpack.c.h.b16 %v55
    %v469 = vunpack.c.l.b16 %v56
    %v470 = vunpack.c.h.b16 %v56
    %v471 = vunpack.c.l.b16 %v57
    %v472 = vunpack.c.h.b16 %v57
    %v473 = vunpack.c.l.b16 %v58
    %v474 = vunpack.c.h.b16 %v58
    %v475 = vunpack.c.l.b16 %v59
    %v476 = vunpack.c.h.b16 %v59
    %v477 = vunpack.c.l.b16 %v60
    %v478 = vunpack.c.h.b16 %v60
    %v479 = vunpack.c.l.b16 %v61
    %v480 = vunpack.c.h.b16 %v61
    %v481 = vunpack.c.l.b16 %v62
    %v482 = vunpack.c.h.b16 %v62
    %v483 = vpack.c.b16 %v459, %v459
    %v484 = vpack.c.b16 %v460, %v460
    %v485 = vpack.c.b16 %v461, %v461
    %v486 = vpack.c.b16 %v462, %v462
    %v487 = vpack.c.b16 %v463, %v463
    %v488 = vpack.c.b16 %v464, %v464
    %v489 = vpack.c.b16 %v465, %v465
    %v490 = vpack.c.b16 %v466, %v466
    %v491 = vpack.c.b16 %v467, %v467
    %v492 = vpack.c.b16 %v468, %v468
    %v493 = vpack.c.b16 %v469, %v469
    %v494 = vpack.c.b16 %v470, %v470
    %v495 = vpack.c.b16 %v471, %v471
    %v496 = vpack.c.b16 %v472, %v472
    %v497 = vpack.c.b16 %v473, %v473
    %v498 = vpack.c.b16 %v474, %v474
    %v499 = vpack.c.b16 %v475, %v475
    %v500 = vpack.c.b16 %v476, %v476
    %v501 = vpack.c.b16 %v477, %v477
    %v502 = vpack.c.b16 %v478, %v478
    %v503 = vpack.c.b16 %v479, %v479
    %v504 = vpack.c.b16 %v480, %v480
    %v505 = vpack.c.b16 %v481, %v481
    %v506 = vpack.c.b16 %v482, %v482
    %v915 = vunpack.c.l.b16 %v63
    %v916 = vunpack.c.l.b16 %v64
    %v917 = vunpack.c.l.b16 %v65
    %v918 = vunpack.c.l.b16 %v66
    %v919 = vunpack.c.l.b16 %v67
    %v920 = vunpack.c.l.b16 %v68
    %v921 = vunpack.c.l.b16 %v69
    %v922 = vunpack.c.l.b16 %v70
    %v923 = vunpack.c.l.b16 %v71
    %v924 = vunpack.c.l.b16 %v72
    %v925 = vunpack.c.l.b16 %v73
    %v926 = vunpack.c.l.b16 %v74
    %v927 = vunpack.c.l.b16 %v75
    %v928 = vunpack.c.l.b16 %v76
    %v929 = vunpack.c.l.b16 %v77
    %v930 = vunpack.c.l.b16 %v78
    %v931 = vunpack.c.l.b16 %v79
    %v932 = vunpack.c.l.b16 %v80
    %v933 = vunpack.c.l.b16 %v81
    %v934 = vunpack.c.l.b16 %v82
    %v935 = vunpack.c.l.b16 %v83
    %v936 = vunpack.c.l.b16 %v84
    %v937 = vunpack.c.l.b16 %v85
    %v938 = vunpack.c.l.b16 %v86
    %v939 = vunpack.c.l.b16 %v87
    %v940 = vunpack.c.l.b16 %v88
    %v941 = vunpack.c.l.b16 %v89
    %v942 = vunpack.c.l.b16 %v90
    %v943 = vunpack.c.l.b16 %v91
    %v944 = vunpack.c.l.b16 %v92
    %v945 = vunpack.c.l.b16 %v93
    %v946 = vunpack.c.l.b16 %v94
    %v947 = vunpack.c.l.b16 %v95
    %v948 = vunpack.c.l.b16 %v96
    %v949 = vunpack.c.l.b16 %v97
    %v950 = vunpack.c.l.b16 %v98
    %v951 = vunpack.c.l.b16 %v99
    %v952 = vunpack.c.l.b16 %v100
    %v953 = vunpack.c.l.b16 %v101
    %v954 = vunpack.c.l.b16 %v102
    %v955 = vunpack.c.l.b16 %v103
    %v956 = vunpack.c.l.b16 %v104
    %v957 = vunpack.c.l.b16 %v105
    %v958 = vunpack.c.l.b16 %v106
    %v959 = vunpack.c.l.b16 %v107
    %v960 = vunpack.c.l.b16 %v108
    %v961 = vunpack.c.l.b16 %v109
    %v962 = vunpack.c.l.b16 %v110
    %v963 = vunpack.c.l.b16 %v111
    %v964 = vunpack.c.l.b16 %v112
    %v965 = vunpack.c.l.b16 %v113
    %v966 = vunpack.c.l.b16 %v114
    %v967 = vunpack.c.l.b16 %v115
    %v968 = vunpack.c.l.b16 %v116
    %v969 = vunpack.c.l.b16 %v117
    %v970 = vunpack.c.l.b16 %v118
    %v971 = vunpack.c.l.b16 %v119
    %v972 = vunpack.c.l.b16 %v120
    %v973 = vunpack.c.l.b16 %v121
    %v974 = vunpack.c.l.b16 %v122
    %v975 = vunpack.c.l.b16 %v123
    %v976 = vunpack.c.l.b16 %v124
    %v977 = vunpack.c.l.b16 %v125
    %v978 = vunpack.c.l.b16 %v126
    %v979 = vunpack.c.l.b16 %v127
    %v980 = vunpack.c.l.b16 %v128
    %v981 = vunpack.c.l.b16 %v129
    %v982 = vunpack.c.l.b16 %v130
    %v983 = vunpack.c.l.b16 %v131
    %v984 = vunpack.c.l.b16 %v132
    %v985 = vunpack.c.l.b16 %v133
    %v986 = vunpack.c.l.b16 %v134
    %v987 = vunpack.c.l.b16 %v135
    %v988 = vunpack.c.l.b16 %v136
    %v989 = vunpack.c.l.b16 %v137
    %v990 = vunpack.c.l.b16 %v138
    %v991 = vunpack.c.l.b16 %v139
    %v992 = vunpack.c.l.b16 %v140
    %v993 = vunpack.c.l.b16 %v141
    %v994 = vunpack.c.l.b16 %v142
    %v995 = vunpack.c.l.b16 %v143
    %v996 = vunpack.c.l.b16 %v144
    %v997 = vunpack.c.l.b16 %v145
    %v998 = vunpack.c.l.b16 %v146
    %v999 = vunpack.c.l.b16 %v147
    %v1000 = vunpack.c.l.b16 %v148
    %v1001 = vunpack.c.l.b16 %v149
    %v1002 = vunpack.c.l.b16 %v150
    %v1003 = vunpack.c.l.b16 %v151
    %v1004 = vunpack.c.l.b16 %v152
    %v1005 = vunpack.c.l.b16 %v153
    %v1006 = vunpack.c.l.b16 %v154
    %v1007 = vunpack.c.l.b16 %v155
    %v1008 = vunpack.c.l.b16 %v156
    %v1009 = vunpack.c.l.b16 %v157
    %v1010 = vunpack.c.l.b16 %v158
    %v1011 = vunpack.c.l.b16 %v159
    %v1012 = vunpack.c.l.b16 %v160
    %v1013 = vunpack.c.l.b16 %v161
    %v1014 = vunpack.c.l.b16 %v162
    %v1015 = vunpack.c.l.b16 %v163
    %v1016 = vunpack.c.l.b16 %v164
    %v1017 = vunpack.c.l.b16 %v165
    %v1018 = vunpack.c.l.b16 %v166
    %v1019 = vunpack.c.l.b16 %v167
    %v1020 = vunpack.c.l.b16 %v168
    %v1021 = vunpack.c.l.b16 %v169
    %v1022 = vunpack.c.l.b16 %v170
    %v1023 = vunpack.c.l.b16 %v171
    %v1024 = vunpack.c.l.b16 %v172
    %v1025 = vunpack.c.l.b16 %v173
    %v1026 = vunpack.c.l.b16 %v174
    %v1027 = vunpack.c.l.b16 %v175
    %v1028 = vunpack.c.l.b16 %v176
    %v1029 = vunpack.c.l.b16 %v177
    %v1030 = vunpack.c.l.b16 %v178
    %v1031 = vunpack.c.l.b16 %v179
    %v1032 = vunpack.c.l.b16 %v180
    %v1033 = vunpack.c.l.b16 %v181
    %v1034 = vunpack.c.l.b16 %v182
    %v1035 = vunpack.c.l.b16 %v183
    %v1036 = vunpack.c.l.b16 %v184
    %v1037 = vunpack.c.l.b16 %v185
    %v1038 = vunpack.c.l.b16 %v186
    %v1039 = vunpack.c.l.b16 %v187
    %v1040 = vunpack.c.l.b16 %v188
    %v1041 = vunpack.c.l.b16 %v189
    %v1042 = vunpack.c.l.b16 %v190
    %v1043 = vunpack.c.l.b16 %v191
    %v1044 = vunpack.c.l.b16 %v192
    %v1045 = vunpack.c.l.b16 %v193
    %v1046 = vunpack.c.l.b16 %v194
    %v1047 = vunpack.c.l.b16 %v195
    %v1048 = vunpack.c.l.b16 %v196
    %v1049 = vunpack.c.l.b16 %v197
    %v1050 = vunpack.c.l.b16 %v198
    %v1051 = vunpack.c.l.b16 %v199
    %v1052 = vunpack.c.l.b16 %v200
    %v1053 = vunpack.c.l.b16 %v201
    %v1054 = vunpack.c.l.b16 %v202
    %v1055 = vunpack.c.l.b16 %v203
    %v1056 = vunpack.c.l.b16 %v204
    %v1057 = vunpack.c.l.b16 %v205
    %v1058 = vunpack.c.l.b16 %v206
    %v1059 = vunpack.c.l.b16 %v207
    %v1060 = vunpack.c.l.b16 %v208
    %v1061 = vunpack.c.l.b16 %v209
    %v1062 = vunpack.c.l.b16 %v210
    %v1063 = vunpack.c.l.b16 %v211
    %v1064 = vunpack.c.l.b16 %v212
    %v1065 = vunpack.c.l.b16 %v213
    %v1066 = vunpack.c.l.b16 %v214
    %v1067 = vunpack.c.l.b16 %v215
    %v1068 = vunpack.c.l.b16 %v216
    %v1069 = vunpack.c.l.b16 %v217
    %v1070 = vunpack.c.l.b16 %v218
    %v1071 = vunpack.c.l.b16 %v219
    %v1072 = vunpack.c.l.b16 %v220
    %v1073 = vunpack.c.l.b16 %v221
    %v1074 = vunpack.c.l.b16 %v222
    %v1075 = vunpack.c.l.b16 %v223
    %v1076 = vunpack.c.l.b16 %v224
    %v1077 = vunpack.c.l.b16 %v225
    %v1078 = vunpack.c.l.b16 %v226
    %v1079 = vunpack.c.l.b16 %v227
    %v1080 = vunpack.c.l.b16 %v228
    %v1081 = vunpack.c.l.b16 %v229
    %v1082 = vunpack.c.l.b16 %v230
    %v1083 = vunpack.c.l.b16 %v231
    %v1084 = vunpack.c.l.b16 %v232
    %v1085 = vunpack.c.l.b16 %v233
    %v1086 = vunpack.c.l.b16 %v234
    %v1087 = vunpack.c.l.b16 %v235
    %v1088 = vunpack.c.l.b16 %v236
    %v1089 = vunpack.c.l.b16 %v237
    %v1090 = vunpack.c.l.b16 %v238
    %v1091 = vunpack.c.l.b16 %v239
    %v1092 = vunpack.c.l.b16 %v240
    %v1093 = vunpack.c.l.b16 %v241
    %v1094 = vunpack.c.l.b16 %v242
    %v1095 = vunpack.c.l.b16 %v243
    %v1096 = vunpack.c.l.b16 %v244
    %v1097 = vunpack.c.l.b16 %v245
    %v1098 = vunpack.c.l.b16 %v246
    %v1099 = vunpack.c.l.b16 %v247
    %v1100 = vunpack.c.l.b16 %v248
    %v1101 = vunpack.c.l.b16 %v249
    %v1102 = vunpack.c.l.b16 %v250
    %v1103 = vunpack.c.l.b16 %v251
    %v1104 = vunpack.c.l.b16 %v252
    %v1105 = vunpack.c.l.b16 %v253
    %v1106 = vunpack.c.l.b16 %v254
    %v1107 = vunpack.c.l.b16 %v255
    %v1108 = vunpack.c.l.b16 %v256
    %v1109 = vunpack.c.l.b16 %v257
    %v1110 = vunpack.c.l.b16 %v258
    %v1111 = vunpack.c.l.b16 %v259
    %v1112 = vunpack.c.l.b16 %v260
    %v1113 = vunpack.c.l.b16 %v261
    %v1114 = vunpack.c.l.b16 %v262
    %v1115 = vunpack.c.l.b16 %v263
    %v1116 = vunpack.c.l.b16 %v264
    %v1117 = vunpack.c.l.b16 %v265
    %v1118 = vunpack.c.l.b16 %v266
    %v1119 = vunpack.c.l.b16 %v267
    %v1120 = vunpack.c.l.b16 %v268
    %v1121 = vunpack.c.l.b16 %v269
    %v1122 = vunpack.c.l.b16 %v270
    %v1123 = vunpack.c.l.b16 %v271
    %v1124 = vunpack.c.l.b16 %v272
    %v1125 = vunpack.c.l.b16 %v273
    %v1126 = vunpack.c.l.b16 %v274
    %v1127 = vunpack.c.l.b16 %v275
    %v1128 = vunpack.c.l.b16 %v276
    %v1129 = vunpack.c.l.b16 %v277
    %v1130 = vunpack.c.l.b16 %v278
    %v1131 = vunpack.c.l.b16 %v279
    %v1132 = vunpack.c.l.b16 %v280
    %v1133 = vunpack.c.l.b16 %v281
    %v1134 = vunpack.c.l.b16 %v282
    %v1135 = vunpack.c.l.b16 %v283
    %v1136 = vunpack.c.l.b16 %v284
    %v1137 = vunpack.c.l.b16 %v285
    %v1138 = vunpack.c.l.b16 %v286
    %v1139 = vunpack.c.l.b16 %v287
    %v1140 = vunpack.c.l.b16 %v288
    %v1141 = vunpack.c.l.b16 %v289
    %v1142 = vunpack.c.l.b16 %v290
    %v1143 = vunpack.c.l.b16 %v291
    %v1144 = vunpack.c.l.b16 %v292
    %v1145 = vunpack.c.l.b16 %v293
    %v1146 = vunpack.c.l.b16 %v294
    %v1147 = vunpack.c.l.b16 %v295
    %v1148 = vunpack.c.l.b16 %v296
    %v1149 = vunpack.c.l.b16 %v297
    %v1150 = vunpack.c.l.b16 %v298
    %v1151 = vunpack.c.l.b16 %v299
    %v1152 = vunpack.c.l.b16 %v300
    %v1153 = vunpack.c.l.b16 %v301
    %v1154 = vunpack.c.l.b16 %v302
    %v1155 = vunpack.c.l.b16 %v303
    %v1156 = vunpack.c.l.b16 %v304
    %v1157 = vunpack.c.l.b16 %v305
    %v1158 = vunpack.c.l.b16 %v306
    %v1159 = vunpack.c.l.b16 %v307
    %v1160 = vunpack.c.l.b16 %v308
    %v1161 = vunpack.c.l.b16 %v309
    %v1162 = vunpack.c.l.b16 %v310
    %v1163 = vunpack.c.l.b16 %v311
    %v1164 = vunpack.c.l.b16 %v312
    %v1165 = vunpack.c.l.b16 %v313
    %v1166 = vunpack.c.l.b16 %v314
    %v1167 = vunpack.c.l.b16 %v315
    %v1168 = vunpack.c.l.b16 %v316
    %v1169 = vunpack.c.l.b16 %v317
    %v1170 = vunpack.c.l.b16 %v318
    %v1171 = vunpack.c.l.b16 %v319
    %v1172 = vunpack.c.l.b16 %v320
    %v1173 = vunpack.c.l.b16 %v321
    %v1174 = vunpack.c.l.b16 %v322
    %v1175 = vunpack.c.l.b16 %v323
    %v1176 = vunpack.c.l.b16 %v324
    %v1177 = vunpack.c.l.b16 %v325
    %v1178 = vunpack.c.l.b16 %v326
    %v1179 = vunpack.c.l.b16 %v327
    %v1180 = vunpack.c.l.b16 %v328
    %v1181 = vunpack.c.l.b16 %v329
    %v1182 = vunpack.c.l.b16 %v330
    %v1183 = vunpack.c.l.b16 %v331
    %v1184 = vunpack.c.l.b16 %v332
    %v1185 = vunpack.c.l.b16 %v333
    %v1186 = vunpack.c.l.b16 %v334
    %v1187 = vunpack.c.l.b16 %v335
    %v1188 = vunpack.c.l.b16 %v336
    %v1189 = vunpack.c.l.b16 %v337
    %v1190 = vunpack.c.l.b16 %v338
    %v1191 = vunpack.c.l.b16 %v339
    %v1192 = vunpack.c.l.b16 %v340
    %v1193 = vunpack.c.l.b16 %v341
    %v1194 = vunpack.c.l.b16 %v342
    %v1195 = vunpack.c.l.b16 %v343
    %v1196 = vunpack.c.l.b16 %v344
    %v1197 = vunpack.c.l.b16 %v345
    %v1198 = vunpack.c.l.b16 %v346
    %v1199 = vunpack.c.l.b16 %v347
    %v1200 = vunpack.c.l.b16 %v348
    %v1201 = vunpack.c.l.b16 %v349
    %v1202 = vunpack.c.l.b16 %v350
    %v1203 = vunpack.c.l.b16 %v351
    %v1204 = vunpack.c.l.b16 %v352
    %v1205 = vunpack.c.l.b16 %v353
    %v1206 = vunpack.c.l.b16 %v354
    %v1207 = vunpack.c.l.b16 %v355
    %v1208 = vunpack.c.l.b16 %v356
    %v1209 = vunpack.c.l.b16 %v357
    %v1210 = vunpack.c.l.b16 %v358
    %v1211 = vunpack.c.l.b16 %v359
    %v1212 = vunpack.c.l.b16 %v360
    %v1213 = vunpack.c.l.b16 %v361
    %v1214 = vunpack.c.l.b16 %v362
    %v1215 = vunpack.c.l.b16 %v363
    %v1216 = vunpack.c.l.b16 %v364
    %v1217 = vunpack.c.l.b16 %v365
    %v1218 = vunpack.c.l.b16 %v366
    %v1219 = vunpack.c.l.b16 %v367
    %v1220 = vunpack.c.l.b16 %v368
    %v1221 = vunpack.c.l.b16 %v369
    %v1222 = vunpack.c.l.b16 %v370
    %v1223 = vunpack.c.l.b16 %v371
    %v1224 = vunpack.c.l.b16 %v372
    %v1225 = vunpack.c.l.b16 %v373
    %v1226 = vunpack.c.l.b16 %v374
    %v1227 = vunpack.c.l.b16 %v375
    %v1228 = vunpack.c.l.b16 %v376
    %v1229 = vunpack.c.l.b16 %v377
    %v1230 = vunpack.c.l.b16 %v378
    %v1231 = vunpack.c.l.b16 %v379
    %v1232 = vunpack.c.l.b16 %v380
    %v1233 = vunpack.c.l.b16 %v381
    %v1234 = vunpack.c.l.b16 %v382
    %v1235 = vunpack.c.l.b16 %v383
    %v1236 = vunpack.c.l.b16 %v384
    %v1237 = vunpack.c.l.b16 %v385
    %v1238 = vunpack.c.l.b16 %v386
    %v1239 = vunpack.c.l.b16 %v387
    %v1240 = vunpack.c.l.b16 %v388
    %v1241 = vunpack.c.l.b16 %v389
    %v1242 = vunpack.c.l.b16 %v390
    %v1243 = vunpack.c.l.b16 %v391
    %v1244 = vunpack.c.l.b16 %v392
    %v1245 = vunpack.c.l.b16 %v393
    %v1246 = vunpack.c.l.b16 %v394
    %v1247 = vunpack.c.l.b16 %v395
    %v1248 = vunpack.c.l.b16 %v396
    %v1249 = vunpack.c.l.b16 %v397
    %v1250 = vunpack.c.l.b16 %v398
    %v1251 = vunpack.c.l.b16 %v399
    %v1252 = vunpack.c.l.b16 %v400
    %v1253 = vunpack.c.l.b16 %v401
    %v1254 = vunpack.c.l.b16 %v402
    %v1255 = vunpack.c.l.b16 %v403
    %v1256 = vunpack.c.l.b16 %v404
    %v1257 = vunpack.c.l.b16 %v405
    %v1258 = vunpack.c.l.b16 %v406
    %v1259 = vunpack.c.l.b16 %v407
    %v1260 = vunpack.c.l.b16 %v408
    %v1261 = vunpack.c.l.b16 %v409
    %v1262 = vunpack.c.l.b16 %v410
    %v1263 = vunpack.c.l.b16 %v411
    %v1264 = vunpack.c.l.b16 %v412
    %v1265 = vunpack.c.l.b16 %v413
    %v1266 = vunpack.c.l.b16 %v414
    %v1267 = vunpack.c.l.b16 %v415
    %v1268 = vunpack.c.l.b16 %v416
    %v1269 = vunpack.c.l.b16 %v417
    %v1270 = vunpack.c.l.b16 %v418
    %v1271 = vunpack.c.l.b16 %v419
    %v1272 = vunpack.c.l.b16 %v420
    %v1273 = vunpack.c.l.b16 %v421
    %v1274 = vunpack.c.l.b16 %v422
    %v1275 = vunpack.c.l.b16 %v423
    %v1276 = vunpack.c.l.b16 %v424
    %v1277 = vunpack.c.l.b16 %v425
    %v1278 = vunpack.c.l.b16 %v426
    %v1279 = vunpack.c.l.b16 %v427
    %v1280 = vunpack.c.l.b16 %v428
    %v1281 = vunpack.c.l.b16 %v429
    %v1282 = vunpack.c.l.b16 %v430
    %v1283 = vunpack.c.l.b16 %v431
    %v1284 = vunpack.c.l.b16 %v432
    %v1285 = vunpack.c.l.b16 %v433
    %v1286 = vunpack.c.l.b16 %v434
    %v1287 = vunpack.c.l.b16 %v435
    %v1288 = vunpack.c.l.b16 %v436
    %v1289 = vunpack.c.l.b16 %v437
    %v1290 = vunpack.c.l.b16 %v438
    %v1291 = vunpack.c.l.b16 %v439
    %v1292 = vunpack.c.l.b16 %v440
    %v1293 = vunpack.c.l.b16 %v441
    %v1294 = vunpack.c.l.b16 %v442
    %v1295 = vunpack.c.l.b16 %v443
    %v1296 = vunpack.c.l.b16 %v444
    %v1297 = vunpack.c.l.b16 %v445
    %v1298 = vunpack.c.l.b16 %v446
    %v1299 = vpack.c.b16 %v916, %v915
    %v1300 = vpack.c.b16 %v918, %v917
    %v1301 = vpack.c.b16 %v920, %v919
    %v1302 = vpack.c.b16 %v922, %v921
    %v1303 = vpack.c.b16 %v924, %v923
    %v1304 = vpack.c.b16 %v926, %v925
    %v1305 = vpack.c.b16 %v928, %v927
    %v1306 = vpack.c.b16 %v930, %v929
    %v1307 = vpack.c.b16 %v932, %v931
    %v1308 = vpack.c.b16 %v934, %v933
    %v1309 = vpack.c.b16 %v936, %v935
    %v1310 = vpack.c.b16 %v938, %v937
    %v1311 = vpack.c.b16 %v940, %v939
    %v1312 = vpack.c.b16 %v942, %v941
    %v1313 = vpack.c.b16 %v944, %v943
    %v1314 = vpack.c.b16 %v946, %v945
    %v1315 = vpack.c.b16 %v948, %v947
    %v1316 = vpack.c.b16 %v950, %v949
    %v1317 = vpack.c.b16 %v952, %v951
    %v1318 = vpack.c.b16 %v954, %v953
    %v1319 = vpack.c.b16 %v956, %v955
    %v1320 = vpack.c.b16 %v958, %v957
    %v1321 = vpack.c.b16 %v960, %v959
    %v1322 = vpack.c.b16 %v962, %v961
    %v1323 = vpack.c.b16 %v964, %v963
    %v1324 = vpack.c.b16 %v966, %v965
    %v1325 = vpack.c.b16 %v968, %v967
    %v1326 = vpack.c.b16 %v970, %v969
    %v1327 = vpack.c.b16 %v972, %v971
    %v1328 = vpack.c.b16 %v974, %v973
    %v1329 = vpack.c.b16 %v976, %v975
    %v1330 = vpack.c.b16 %v978, %v977
    %v1331 = vpack.c.b16 %v980, %v979
    %v1332 = vpack.c.b16 %v982, %v981
    %v1333 = vpack.c.b16 %v984, %v983
    %v1334 = vpack.c.b16 %v986, %v985
    %v1335 = vpack.c.b16 %v988, %v987
    %v1336 = vpack.c.b16 %v990, %v989
    %v1337 = vpack.c.b16 %v992, %v991
    %v1338 = vpack.c.b16 %v994, %v993
    %v1339 = vpack.c.b16 %v996, %v995
    %v1340 = vpack.c.b16 %v998, %v997
    %v1341 = vpack.c.b16 %v1000, %v999
    %v1342 = vpack.c.b16 %v1002, %v1001
    %v1343 = vpack.c.b16 %v1004, %v1003
    %v1344 = vpack.c.b16 %v1006, %v1005
    %v1345 = vpack.c.b16 %v1008, %v1007
    %v1346 = vpack.c.b16 %v1010, %v1009
    %v1347 = vpack.c.b16 %v1012, %v1011
    %v1348 = vpack.c.b16 %v1014, %v1013
    %v1349 = vpack.c.b16 %v1016, %v1015
    %v1350 = vpack.c.b16 %v1018, %v1017
    %v1351 = vpack.c.b16 %v1020, %v1019
    %v1352 = vpack.c.b16 %v1022, %v1021
    %v1353 = vpack.c.b16 %v1024, %v1023
    %v1354 = vpack.c.b16 %v1026, %v1025
    %v1355 = vpack.c.b16 %v1028, %v1027
    %v1356 = vpack.c.b16 %v1030, %v1029
    %v1357 = vpack.c.b16 %v1032, %v1031
    %v1358 = vpack.c.b16 %v1034, %v1033
    %v1359 = vpack.c.b16 %v1036, %v1035
    %v1360 = vpack.c.b16 %v1038, %v1037
    %v1361 = vpack.c.b16 %v1040, %v1039
    %v1362 = vpack.c.b16 %v1042, %v1041
    %v1363 = vpack.c.b16 %v1044, %v1043
    %v1364 = vpack.c.b16 %v1046, %v1045
    %v1365 = vpack.c.b16 %v1048, %v1047
    %v1366 = vpack.c.b16 %v1050, %v1049
    %v1367 = vpack.c.b16 %v1052, %v1051
    %v1368 = vpack.c.b16 %v1054, %v1053
    %v1369 = vpack.c.b16 %v1056, %v1055
    %v1370 = vpack.c.b16 %v1058, %v1057
    %v1371 = vpack.c.b16 %v1060, %v1059
    %v1372 = vpack.c.b16 %v1062, %v1061
    %v1373 = vpack.c.b16 %v1064, %v1063
    %v1374 = vpack.c.b16 %v1066, %v1065
    %v1375 = vpack.c.b16 %v1068, %v1067
    %v1376 = vpack.c.b16 %v1070, %v1069
    %v1377 = vpack.c.b16 %v1072, %v1071
    %v1378 = vpack.c.b16 %v1074, %v1073
    %v1379 = vpack.c.b16 %v1076, %v1075
    %v1380 = vpack.c.b16 %v1078, %v1077
    %v1381 = vpack.c.b16 %v1080, %v1079
    %v1382 = vpack.c.b16 %v1082, %v1081
    %v1383 = vpack.c.b16 %v1084, %v1083
    %v1384 = vpack.c.b16 %v1086, %v1085
    %v1385 = vpack.c.b16 %v1088, %v1087
    %v1386 = vpack.c.b16 %v1090, %v1089
    %v1387 = vpack.c.b16 %v1092, %v1091
    %v1388 = vpack.c.b16 %v1094, %v1093
    %v1389 = vpack.c.b16 %v1096, %v1095
    %v1390 = vpack.c.b16 %v1098, %v1097
    %v1391 = vpack.c.b16 %v1100, %v1099
    %v1392 = vpack.c.b16 %v1102, %v1101
    %v1393 = vpack.c.b16 %v1104, %v1103
    %v1394 = vpack.c.b16 %v1106, %v1105
    %v1395 = vpack.c.b16 %v1108, %v1107
    %v1396 = vpack.c.b16 %v1110, %v1109
    %v1397 = vpack.c.b16 %v1112, %v1111
    %v1398 = vpack.c.b16 %v1114, %v1113
    %v1399 = vpack.c.b16 %v1116, %v1115
    %v1400 = vpack.c.b16 %v1118, %v1117
    %v1401 = vpack.c.b16 %v1120, %v1119
    %v1402 = vpack.c.b16 %v1122, %v1121
    %v1403 = vpack.c.b16 %v1124, %v1123
    %v1404 = vpack.c.b16 %v1126, %v1125
    %v1405 = vpack.c.b16 %v1128, %v1127
    %v1406 = vpack.c.b16 %v1130, %v1129
    %v1407 = vpack.c.b16 %v1132, %v1131
    %v1408 = vpack.c.b16 %v1134, %v1133
    %v1409 = vpack.c.b16 %v1136, %v1135
    %v1410 = vpack.c.b16 %v1138, %v1137
    %v1411 = vpack.c.b16 %v1140, %v1139
    %v1412 = vpack.c.b16 %v1142, %v1141
    %v1413 = vpack.c.b16 %v1144, %v1143
    %v1414 = vpack.c.b16 %v1146, %v1145
    %v1415 = vpack.c.b16 %v1148, %v1147
    %v1416 = vpack.c.b16 %v1150, %v1149
    %v1417 = vpack.c.b16 %v1152, %v1151
    %v1418 = vpack.c.b16 %v1154, %v1153
    %v1419 = vpack.c.b16 %v1156, %v1155
    %v1420 = vpack.c.b16 %v1158, %v1157
    %v1421 = vpack.c.b16 %v1160, %v1159
    %v1422 = vpack.c.b16 %v1162, %v1161
    %v1423 = vpack.c.b16 %v1164, %v1163
    %v1424 = vpack.c.b16 %v1166, %v1165
    %v1425 = vpack.c.b16 %v1168, %v1167
    %v1426 = vpack.c.b16 %v1170, %v1169
    %v1427 = vpack.c.b16 %v1172, %v1171
    %v1428 = vpack.c.b16 %v1174, %v1173
    %v1429 = vpack.c.b16 %v1176, %v1175
    %v1430 = vpack.c.b16 %v1178, %v1177
    %v1431 = vpack.c.b16 %v1180, %v1179
    %v1432 = vpack.c.b16 %v1182, %v1181
    %v1433 = vpack.c.b16 %v1184, %v1183
    %v1434 = vpack.c.b16 %v1186, %v1185
    %v1435 = vpack.c.b16 %v1188, %v1187
    %v1436 = vpack.c.b16 %v1190, %v1189
    %v1437 = vpack.c.b16 %v1192, %v1191
    %v1438 = vpack.c.b16 %v1194, %v1193
    %v1439 = vpack.c.b16 %v1196, %v1195
    %v1440 = vpack.c.b16 %v1198, %v1197
    %v1441 = vpack.c.b16 %v1200, %v1199
    %v1442 = vpack.c.b16 %v1202, %v1201
    %v1443 = vpack.c.b16 %v1204, %v1203
    %v1444 = vpack.c.b16 %v1206, %v1205
    %v1445 = vpack.c.b16 %v1208, %v1207
    %v1446 = vpack.c.b16 %v1210, %v1209
    %v1447 = vpack.c.b16 %v1212, %v1211
    %v1448 = vpack.c.b16 %v1214, %v1213
    %v1449 = vpack.c.b16 %v1216, %v1215
    %v1450 = vpack.c.b16 %v1218, %v1217
    %v1451 = vpack.c.b16 %v1220, %v1219
    %v1452 = vpack.c.b16 %v1222, %v1221
    %v1453 = vpack.c.b16 %v1224, %v1223
    %v1454 = vpack.c.b16 %v1226, %v1225
    %v1455 = vpack.c.b16 %v1228, %v1227
    %v1456 = vpack.c.b16 %v1230, %v1229
    %v1457 = vpack.c.b16 %v1232, %v1231
    %v1458 = vpack.c.b16 %v1234, %v1233
    %v1459 = vpack.c.b16 %v1236, %v1235
    %v1460 = vpack.c.b16 %v1238, %v1237
    %v1461 = vpack.c.b16 %v1240, %v1239
    %v1462 = vpack.c.b16 %v1242, %v1241
    %v1463 = vpack.c.b16 %v1244, %v1243
    %v1464 = vpack.c.b16 %v1246, %v1245
    %v1465 = vpack.c.b16 %v1248, %v1247
    %v1466 = vpack.c.b16 %v1250, %v1249
    %v1467 = vpack.c.b16 %v1252, %v1251
    %v1468 = vpack.c.b16 %v1254, %v1253
    %v1469 = vpack.c.b16 %v1256, %v1255
    %v1470 = vpack.c.b16 %v1258, %v1257
    %v1471 = vpack.c.b16 %v1260, %v1259
    %v1472 = vpack.c.b16 %v1262, %v1261
    %v1473 = vpack.c.b16 %v1264, %v1263
    %v1474 = vpack.c.b16 %v1266, %v1265
    %v1475 = vpack.c.b16 %v1268, %v1267
    %v1476 = vpack.c.b16 %v1270, %v1269
    %v1477 = vpack.c.b16 %v1272, %v1271
    %v1478 = vpack.c.b16 %v1274, %v1273
    %v1479 = vpack.c.b16 %v1276, %v1275
    %v1480 = vpack.c.b16 %v1278, %v1277
    %v1481 = vpack.c.b16 %v1280, %v1279
    %v1482 = vpack.c.b16 %v1282, %v1281
    %v1483 = vpack.c.b16 %v1284, %v1283
    %v1484 = vpack.c.b16 %v1286, %v1285
    %v1485 = vpack.c.b16 %v1288, %v1287
    %v1486 = vpack.c.b16 %v1290, %v1289
    %v1487 = vpack.c.b16 %v1292, %v1291
    %v1488 = vpack.c.b16 %v1294, %v1293
    %v1489 = vpack.c.b16 %v1296, %v1295
    %v1490 = vpack.c.b16 %v1298, %v1297
    %1683 = vmatpush.bf16.msra.mxu0 %v1306
    %1684 = vmatpush.bf16.msra.mxu0 %v1305
    %1685 = vmatpush.bf16.msra.mxu0 %v1304
    %1686 = vmatpush.bf16.msra.mxu0 %v1303
    %1687 = vmatpush.bf16.msra.mxu0 %v1302
    %1688 = vmatpush.bf16.msra.mxu0 %v1301
    %1689 = vmatpush.bf16.msra.mxu0 %v1300
    %1690 = vmatpush.bf16.msra.mxu0 %v1299
    %1691 = vmatmul.bf16.gmra.mxu0 %v483
    %v1692 = vpop.f32.mrf.mxu0
    %v1693 = vadd.f32 0.0, %v1692
    %v1694 = vpop.f32.mrf.mxu0
    %1695 = vdwg.mxu0
    %1696 = vmatpush.bf16.msra.mxu0 %v1314
    %1697 = vmatpush.bf16.msra.mxu0 %v1313
    %1698 = vmatpush.bf16.msra.mxu0 %v1312
    %1699 = vmatpush.bf16.msra.mxu0 %v1311
    %1700 = vmatpush.bf16.msra.mxu0 %v1310
    %1701 = vmatpush.bf16.msra.mxu0 %v1309
    %1702 = vmatpush.bf16.msra.mxu0 %v1308
    %1703 = vmatpush.bf16.msra.mxu0 %v1307
    %1704 = vmatmul.bf16.gmra.mxu0 %v484
    %v1705 = vpop.f32.mrf.mxu0
    %v1706 = vadd.f32 %v1693, %v1705
    %v1707 = vpop.f32.mrf.mxu0
    %1708 = vdwg.mxu0
    %1709 = vmatpush.bf16.msra.mxu0 %v1322
    %1710 = vmatpush.bf16.msra.mxu0 %v1321
    %1711 = vmatpush.bf16.msra.mxu0 %v1320
    %1712 = vmatpush.bf16.msra.mxu0 %v1319
    %1713 = vmatpush.bf16.msra.mxu0 %v1318
    %1714 = vmatpush.bf16.msra.mxu0 %v1317
    %1715 = vmatpush.bf16.msra.mxu0 %v1316
    %1716 = vmatpush.bf16.msra.mxu0 %v1315
    %1717 = vmatmul.bf16.gmra.mxu0 %v485
    %v1718 = vpop.f32.mrf.mxu0
    %v1719 = vadd.f32 %v1706, %v1718
    %v1720 = vpop.f32.mrf.mxu0
    %1721 = vdwg.mxu0
    %1722 = vmatpush.bf16.msra.mxu0 %v1330
    %1723 = vmatpush.bf16.msra.mxu0 %v1329
    %1724 = vmatpush.bf16.msra.mxu0 %v1328
    %1725 = vmatpush.bf16.msra.mxu0 %v1327
    %1726 = vmatpush.bf16.msra.mxu0 %v1326
    %1727 = vmatpush.bf16.msra.mxu0 %v1325
    %1728 = vmatpush.bf16.msra.mxu0 %v1324
    %1729 = vmatpush.bf16.msra.mxu0 %v1323
    %1730 = vmatmul.bf16.gmra.mxu0 %v486
    %v1731 = vpop.f32.mrf.mxu0
    %v1732 = vadd.f32 %v1719, %v1731
    %v1733 = vpop.f32.mrf.mxu0
    %1734 = vdwg.mxu0
    %1735 = vmatpush.bf16.msra.mxu0 %v1338
    %1736 = vmatpush.bf16.msra.mxu0 %v1337
    %1737 = vmatpush.bf16.msra.mxu0 %v1336
    %1738 = vmatpush.bf16.msra.mxu0 %v1335
    %1739 = vmatpush.bf16.msra.mxu0 %v1334
    %1740 = vmatpush.bf16.msra.mxu0 %v1333
    %1741 = vmatpush.bf16.msra.mxu0 %v1332
    %1742 = vmatpush.bf16.msra.mxu0 %v1331
    %1743 = vmatmul.bf16.gmra.mxu0 %v487
    %v1744 = vpop.f32.mrf.mxu0
    %v1745 = vadd.f32 %v1732, %v1744
    %v1746 = vpop.f32.mrf.mxu0
    %1747 = vdwg.mxu0
    %1748 = vmatpush.bf16.msra.mxu0 %v1346
    %1749 = vmatpush.bf16.msra.mxu0 %v1345
    %1750 = vmatpush.bf16.msra.mxu0 %v1344
    %1751 = vmatpush.bf16.msra.mxu0 %v1343
    %1752 = vmatpush.bf16.msra.mxu0 %v1342
    %1753 = vmatpush.bf16.msra.mxu0 %v1341
    %1754 = vmatpush.bf16.msra.mxu0 %v1340
    %1755 = vmatpush.bf16.msra.mxu0 %v1339
    %1756 = vmatmul.bf16.gmra.mxu0 %v488
    %v1757 = vpop.f32.mrf.mxu0
    %v1758 = vadd.f32 %v1745, %v1757
    %v1759 = vpop.f32.mrf.mxu0
    %1760 = vdwg.mxu0
    %1761 = vmatpush.bf16.msra.mxu0 %v1354
    %1762 = vmatpush.bf16.msra.mxu0 %v1353
    %1763 = vmatpush.bf16.msra.mxu0 %v1352
    %1764 = vmatpush.bf16.msra.mxu0 %v1351
    %1765 = vmatpush.bf16.msra.mxu0 %v1350
    %1766 = vmatpush.bf16.msra.mxu0 %v1349
    %1767 = vmatpush.bf16.msra.mxu0 %v1348
    %1768 = vmatpush.bf16.msra.mxu0 %v1347
    %1769 = vmatmul.bf16.gmra.mxu0 %v489
    %v1770 = vpop.f32.mrf.mxu0
    %v1771 = vadd.f32 %v1758, %v1770
    %v1772 = vpop.f32.mrf.mxu0
    %1773 = vdwg.mxu0
    %1774 = vmatpush.bf16.msra.mxu0 %v1362
    %1775 = vmatpush.bf16.msra.mxu0 %v1361
    %1776 = vmatpush.bf16.msra.mxu0 %v1360
    %1777 = vmatpush.bf16.msra.mxu0 %v1359
    %1778 = vmatpush.bf16.msra.mxu0 %v1358
    %1779 = vmatpush.bf16.msra.mxu0 %v1357
    %1780 = vmatpush.bf16.msra.mxu0 %v1356
    %1781 = vmatpush.bf16.msra.mxu0 %v1355
    %1782 = vmatmul.bf16.gmra.mxu0 %v490
    %v1783 = vpop.f32.mrf.mxu0
    %v1784 = vadd.f32 %v1771, %v1783
    %v1785 = vpop.f32.mrf.mxu0
    %1786 = vdwg.mxu0
    %1787 = vmatpush.bf16.msra.mxu0 %v1370
    %1788 = vmatpush.bf16.msra.mxu0 %v1369
    %1789 = vmatpush.bf16.msra.mxu0 %v1368
    %1790 = vmatpush.bf16.msra.mxu0 %v1367
    %1791 = vmatpush.bf16.msra.mxu0 %v1366
    %1792 = vmatpush.bf16.msra.mxu0 %v1365
    %1793 = vmatpush.bf16.msra.mxu0 %v1364
    %1794 = vmatpush.bf16.msra.mxu0 %v1363
    %1795 = vmatmul.bf16.gmra.mxu0 %v491
    %v1796 = vpop.f32.mrf.mxu0
    %v1797 = vadd.f32 %v1784, %v1796
    %v1798 = vpop.f32.mrf.mxu0
    %1799 = vdwg.mxu0
    %1800 = vmatpush.bf16.msra.mxu0 %v1378
    %1801 = vmatpush.bf16.msra.mxu0 %v1377
    %1802 = vmatpush.bf16.msra.mxu0 %v1376
    %1803 = vmatpush.bf16.msra.mxu0 %v1375
    %1804 = vmatpush.bf16.msra.mxu0 %v1374
    %1805 = vmatpush.bf16.msra.mxu0 %v1373
    %1806 = vmatpush.bf16.msra.mxu0 %v1372
    %1807 = vmatpush.bf16.msra.mxu0 %v1371
    %1808 = vmatmul.bf16.gmra.mxu0 %v492
    %v1809 = vpop.f32.mrf.mxu0
    %v1810 = vadd.f32 %v1797, %v1809
    %v1811 = vpop.f32.mrf.mxu0
    %1812 = vdwg.mxu0
    %1813 = vmatpush.bf16.msra.mxu0 %v1386
    %1814 = vmatpush.bf16.msra.mxu0 %v1385
    %1815 = vmatpush.bf16.msra.mxu0 %v1384
    %1816 = vmatpush.bf16.msra.mxu0 %v1383
    %1817 = vmatpush.bf16.msra.mxu0 %v1382
    %1818 = vmatpush.bf16.msra.mxu0 %v1381
    %1819 = vmatpush.bf16.msra.mxu0 %v1380
    %1820 = vmatpush.bf16.msra.mxu0 %v1379
    %1821 = vmatmul.bf16.gmra.mxu0 %v493
    %v1822 = vpop.f32.mrf.mxu0
    %v1823 = vadd.f32 %v1810, %v1822
    %v1824 = vpop.f32.mrf.mxu0
    %1825 = vdwg.mxu0
    %1826 = vmatpush.bf16.msra.mxu0 %v1394
    %1827 = vmatpush.bf16.msra.mxu0 %v1393
    %1828 = vmatpush.bf16.msra.mxu0 %v1392
    %1829 = vmatpush.bf16.msra.mxu0 %v1391
    %1830 = vmatpush.bf16.msra.mxu0 %v1390
    %1831 = vmatpush.bf16.msra.mxu0 %v1389
    %1832 = vmatpush.bf16.msra.mxu0 %v1388
    %1833 = vmatpush.bf16.msra.mxu0 %v1387
    %1834 = vmatmul.bf16.gmra.mxu0 %v494
    %v1835 = vpop.f32.mrf.mxu0
    %v1836 = vadd.f32 %v1823, %v1835
    %v1837 = vpop.f32.mrf.mxu0
    %1838 = vdwg.mxu0
    %1839 = vmatpush.bf16.msra.mxu0 %v1402
    %1840 = vmatpush.bf16.msra.mxu0 %v1401
    %1841 = vmatpush.bf16.msra.mxu0 %v1400
    %1842 = vmatpush.bf16.msra.mxu0 %v1399
    %1843 = vmatpush.bf16.msra.mxu0 %v1398
    %1844 = vmatpush.bf16.msra.mxu0 %v1397
    %1845 = vmatpush.bf16.msra.mxu0 %v1396
    %1846 = vmatpush.bf16.msra.mxu0 %v1395
    %1847 = vmatmul.bf16.gmra.mxu0 %v495
    %v1848 = vpop.f32.mrf.mxu0
    %v1849 = vadd.f32 %v1836, %v1848
    %v1850 = vpop.f32.mrf.mxu0
    %1851 = vdwg.mxu0
    %1852 = vmatpush.bf16.msra.mxu0 %v1410
    %1853 = vmatpush.bf16.msra.mxu0 %v1409
    %1854 = vmatpush.bf16.msra.mxu0 %v1408
    %1855 = vmatpush.bf16.msra.mxu0 %v1407
    %1856 = vmatpush.bf16.msra.mxu0 %v1406
    %1857 = vmatpush.bf16.msra.mxu0 %v1405
    %1858 = vmatpush.bf16.msra.mxu0 %v1404
    %1859 = vmatpush.bf16.msra.mxu0 %v1403
    %1860 = vmatmul.bf16.gmra.mxu0 %v496
    %v1861 = vpop.f32.mrf.mxu0
    %v1862 = vadd.f32 %v1849, %v1861
    %v1863 = vpop.f32.mrf.mxu0
    %1864 = vdwg.mxu0
    %1865 = vmatpush.bf16.msra.mxu0 %v1418
    %1866 = vmatpush.bf16.msra.mxu0 %v1417
    %1867 = vmatpush.bf16.msra.mxu0 %v1416
    %1868 = vmatpush.bf16.msra.mxu0 %v1415
    %1869 = vmatpush.bf16.msra.mxu0 %v1414
    %1870 = vmatpush.bf16.msra.mxu0 %v1413
    %1871 = vmatpush.bf16.msra.mxu0 %v1412
    %1872 = vmatpush.bf16.msra.mxu0 %v1411
    %1873 = vmatmul.bf16.gmra.mxu0 %v497
    %v1874 = vpop.f32.mrf.mxu0
    %v1875 = vadd.f32 %v1862, %v1874
    %v1876 = vpop.f32.mrf.mxu0
    %1877 = vdwg.mxu0
    %1878 = vmatpush.bf16.msra.mxu0 %v1426
    %1879 = vmatpush.bf16.msra.mxu0 %v1425
    %1880 = vmatpush.bf16.msra.mxu0 %v1424
    %1881 = vmatpush.bf16.msra.mxu0 %v1423
    %1882 = vmatpush.bf16.msra.mxu0 %v1422
    %1883 = vmatpush.bf16.msra.mxu0 %v1421
    %1884 = vmatpush.bf16.msra.mxu0 %v1420
    %1885 = vmatpush.bf16.msra.mxu0 %v1419
    %1886 = vmatmul.bf16.gmra.mxu0 %v498
    %v1887 = vpop.f32.mrf.mxu0
    %v1888 = vadd.f32 %v1875, %v1887
    %v1889 = vpop.f32.mrf.mxu0
    %1890 = vdwg.mxu0
    %1891 = vmatpush.bf16.msra.mxu0 %v1434
    %1892 = vmatpush.bf16.msra.mxu0 %v1433
    %1893 = vmatpush.bf16.msra.mxu0 %v1432
    %1894 = vmatpush.bf16.msra.mxu0 %v1431
    %1895 = vmatpush.bf16.msra.mxu0 %v1430
    %1896 = vmatpush.bf16.msra.mxu0 %v1429
    %1897 = vmatpush.bf16.msra.mxu0 %v1428
    %1898 = vmatpush.bf16.msra.mxu0 %v1427
    %1899 = vmatmul.bf16.gmra.mxu0 %v499
    %v1900 = vpop.f32.mrf.mxu0
    %v1901 = vadd.f32 %v1888, %v1900
    %v1902 = vpop.f32.mrf.mxu0
    %1903 = vdwg.mxu0
    %1904 = vmatpush.bf16.msra.mxu0 %v1442
    %1905 = vmatpush.bf16.msra.mxu0 %v1441
    %1906 = vmatpush.bf16.msra.mxu0 %v1440
    %1907 = vmatpush.bf16.msra.mxu0 %v1439
    %1908 = vmatpush.bf16.msra.mxu0 %v1438
    %1909 = vmatpush.bf16.msra.mxu0 %v1437
    %1910 = vmatpush.bf16.msra.mxu0 %v1436
    %1911 = vmatpush.bf16.msra.mxu0 %v1435
    %1912 = vmatmul.bf16.gmra.mxu0 %v500
    %v1913 = vpop.f32.mrf.mxu0
    %v1914 = vadd.f32 %v1901, %v1913
    %v1915 = vpop.f32.mrf.mxu0
    %1916 = vdwg.mxu0
    %1917 = vmatpush.bf16.msra.mxu0 %v1450
    %1918 = vmatpush.bf16.msra.mxu0 %v1449
    %1919 = vmatpush.bf16.msra.mxu0 %v1448
    %1920 = vmatpush.bf16.msra.mxu0 %v1447
    %1921 = vmatpush.bf16.msra.mxu0 %v1446
    %1922 = vmatpush.bf16.msra.mxu0 %v1445
    %1923 = vmatpush.bf16.msra.mxu0 %v1444
    %1924 = vmatpush.bf16.msra.mxu0 %v1443
    %1925 = vmatmul.bf16.gmra.mxu0 %v501
    %v1926 = vpop.f32.mrf.mxu0
    %v1927 = vadd.f32 %v1914, %v1926
    %v1928 = vpop.f32.mrf.mxu0
    %1929 = vdwg.mxu0
    %1930 = vmatpush.bf16.msra.mxu0 %v1458
    %1931 = vmatpush.bf16.msra.mxu0 %v1457
    %1932 = vmatpush.bf16.msra.mxu0 %v1456
    %1933 = vmatpush.bf16.msra.mxu0 %v1455
    %1934 = vmatpush.bf16.msra.mxu0 %v1454
    %1935 = vmatpush.bf16.msra.mxu0 %v1453
    %1936 = vmatpush.bf16.msra.mxu0 %v1452
    %1937 = vmatpush.bf16.msra.mxu0 %v1451
    %1938 = vmatmul.bf16.gmra.mxu0 %v502
    %v1939 = vpop.f32.mrf.mxu0
    %v1940 = vadd.f32 %v1927, %v1939
    %v1941 = vpop.f32.mrf.mxu0
    %1942 = vdwg.mxu0
    %1943 = vmatpush.bf16.msra.mxu0 %v1466
    %1944 = vmatpush.bf16.msra.mxu0 %v1465
    %1945 = vmatpush.bf16.msra.mxu0 %v1464
    %1946 = vmatpush.bf16.msra.mxu0 %v1463
    %1947 = vmatpush.bf16.msra.mxu0 %v1462
    %1948 = vmatpush.bf16.msra.mxu0 %v1461
    %1949 = vmatpush.bf16.msra.mxu0 %v1460
    %1950 = vmatpush.bf16.msra.mxu0 %v1459
    %1951 = vmatmul.bf16.gmra.mxu0 %v503
    %v1952 = vpop.f32.mrf.mxu0
    %v1953 = vadd.f32 %v1940, %v1952
    %v1954 = vpop.f32.mrf.mxu0
    %1955 = vdwg.mxu0
    %1956 = vmatpush.bf16.msra.mxu0 %v1474
    %1957 = vmatpush.bf16.msra.mxu0 %v1473
    %1958 = vmatpush.bf16.msra.mxu0 %v1472
    %1959 = vmatpush.bf16.msra.mxu0 %v1471
    %1960 = vmatpush.bf16.msra.mxu0 %v1470
    %1961 = vmatpush.bf16.msra.mxu0 %v1469
    %1962 = vmatpush.bf16.msra.mxu0 %v1468
    %1963 = vmatpush.bf16.msra.mxu0 %v1467
    %1964 = vmatmul.bf16.gmra.mxu0 %v504
    %v1965 = vpop.f32.mrf.mxu0
    %v1966 = vadd.f32 %v1953, %v1965
    %v1967 = vpop.f32.mrf.mxu0
    %1968 = vdwg.mxu0
    %1969 = vmatpush.bf16.msra.mxu0 %v1482
    %1970 = vmatpush.bf16.msra.mxu0 %v1481
    %1971 = vmatpush.bf16.msra.mxu0 %v1480
    %1972 = vmatpush.bf16.msra.mxu0 %v1479
    %1973 = vmatpush.bf16.msra.mxu0 %v1478
    %1974 = vmatpush.bf16.msra.mxu0 %v1477
    %1975 = vmatpush.bf16.msra.mxu0 %v1476
    %1976 = vmatpush.bf16.msra.mxu0 %v1475
    %1977 = vmatmul.bf16.gmra.mxu0 %v505
    %v1978 = vpop.f32.mrf.mxu0
    %v1979 = vadd.f32 %v1966, %v1978
    %v1980 = vpop.f32.mrf.mxu0
    %1981 = vdwg.mxu0
    %1982 = vmatpush.bf16.msra.mxu0 %v1490
    %1983 = vmatpush.bf16.msra.mxu0 %v1489
    %1984 = vmatpush.bf16.msra.mxu0 %v1488
    %1985 = vmatpush.bf16.msra.mxu0 %v1487
    %1986 = vmatpush.bf16.msra.mxu0 %v1486
    %1987 = vmatpush.bf16.msra.mxu0 %v1485
    %1988 = vmatpush.bf16.msra.mxu0 %v1484
    %1989 = vmatpush.bf16.msra.mxu0 %v1483
    %1990 = vmatmul.bf16.gmra.mxu0 %v506
    %v1991 = vpop.f32.mrf.mxu0
    %v1992 = vadd.f32 %v1979, %v1991
    %v1993 = vpop.f32.mrf.mxu0
    %1994 = vdwg.mxu0
    %v1995 = vadd.f32 %v50, %v1992
    %1996 = vst [vmem:[#allocation7] sm:$0xff] %v1995
    // Predicated region
    $region26: #{tpu_custom_call.1} parent=1 // pred_check
      %p1997 = pneg %p45
    $region27: #{tpu_custom_call.1} parent=1 // pred_check_branch
      %1999 = sbr.rel (%p1997) target = $region29
    $region28: #{tpu_custom_call.1} parent=1 // pred_region
      %v2000 = vld [vmem:[#allocation7] sm:$0xff]
      %v2001 = vld [vmem:[%s2] sm:$0x1]
      %v2003 = vperm.slane %v2001, 0
      %v2005 = vadd.f32 %v2000, %v2003
      %v2006 = vmul.f32 %v2005, %v2005
      %2007 = vadd.xlane.f32.xlu0 %v2006
      %v2008 = vpop.xlane.xlu0 %2007
      %v2009 = vmax.f32 %v2008, 1e-16
      %v2010 = vrsqrt.pop %v2009
      %v2011 = vmul.f32 %v2010, %v2009
      %v2012 = vmul.f32 %v2011, %v2010
      %v2013 = vmul.f32 0.5, %v2012
      %v2014 = vsub.f32 1.5, %v2013
      %v2015 = vmul.f32 %v2010, %v2014
      %vm2016 = vweird.f32 %v2009
      %vm2017 = vweird.f32 %v2010
      %vm2018 = vmor %vm2016, %vm2017
      %v2019 = vsel %vm2018, %v2010, %v2015
      %v2020 = vmul.f32 %v2005, %v2019
      %2021 = vst [vmem:[#allocation7] sm:$0xff] %v2020
    $region29: #{tpu_custom_call.1} parent=1 // pred_fallthru
      _
    // Predicated region
    $region30: #{tpu_custom_call.1} parent=1 // pred_check
      _
    $region31: #{tpu_custom_call.1} parent=1 // pred_check_branch
      %2023 = sbr.rel (0) target = $region33
    $region32: #{tpu_custom_call.1} parent=1 // pred_region
      %2025 = vsyncadd [#allocation4], 0
      %s2027 = sshll.u32 [#allocation7], 4
      %s2028 = int_to_ptr.vmem [resolvable:$true] %s2027
      %s2029 = sshll.u32 %s3, 4
      %s2030 = int_to_ptr.hbm [resolvable:$true] %s2029
      %2032 = dma.vmem_to_hbm [thread:$0]  %s2028, 128, %s2030, [#allocation4]
    $region33: #{tpu_custom_call.1} parent=1 // pred_fallthru
      _
    // Predicated region
    $region34: #{tpu_custom_call.1} parent=1 // pred_check
      _
    $region35: #{tpu_custom_call.1} parent=1 // pred_check_branch
      %2034 = sbr.rel (0) target = $region37
    $region36: #{tpu_custom_call.1} parent=1 // pred_region
      %2036 = dma.done [#allocation4], 128
    $region37: #{tpu_custom_call.1} parent=1 // pred_fallthru
      _
    %2037 = vsyncpa [#allocation3], 1
    %2038 = vsyncpa [#allocation6], 1
    %2039 = vsyncpa [#allocation4], 1

</llo_original>
